<compile_context>
chip_gen: v7x
topology: tpu7x:2x2x1
jax: 0.10.0
libtpu: 0.0.40
codegen_flags: <defaults>
</compile_context>

<pallas_src>
import functools
import math

import jax
import jax.numpy as jnp
from jax import lax
from jax.experimental import pallas as pl
from jax.experimental.pallas import tpu as pltpu


# ----------------------------------------------------------------------------
# Pallas kernel: 3x3 / stride-2 / pad-1 conv, whole batch, one Cout tile
# ----------------------------------------------------------------------------

def _conv3x3_s2_kernel(x_ref, w_ref, b_ref, o_ref, col_ref, *, B, Ho, Wo, Cin):
    """x_ref  : (B, Hh, 2, Wh, 2*Cin) bf16, padded NHWC input reshaped so that
                x_ref[b, hh, py, wh, px*Cin + c] == x_pad[b, 2*hh+py, 2*wh+px, c]
       w_ref  : (9*Cin, TN) bf16, rows ordered (dy, dx, cin)
       b_ref  : (1, TN) f32
       o_ref  : (B*Ho*Wo, TN) f32
       col_ref: (B*Ho*Wo, 9*Cin) bf16 VMEM scratch (im2col LHS)
    """
    M = B * Ho * Wo

    # ---- im2col: each of the 9 taps is a contiguous slice of x_ref and lands in an
    #      aligned, 128-multiple lane block of the scratch.
    for dy in range(3):
        for dx in range(3):
            py, oy = dy % 2, dy // 2
            px, ox = dx % 2, dx // 2
            tap = x_ref[:, oy:oy + Ho, py:py + 1, ox:ox + Wo,
                        px * Cin:(px + 1) * Cin]            # (B, Ho, 1, Wo, Cin) bf16
            t = 3 * dy + dx
            col_ref[:, t * Cin:(t + 1) * Cin] = tap.reshape(M, Cin)

    # ---- single big-K MXU matmul (K = 9*Cin) with f32 accumulation + bias epilogue.
    acc = jnp.dot(col_ref[...], w_ref[...], preferred_element_type=jnp.float32)
    o_ref[...] = (acc + b_ref[...]).astype(o_ref.dtype)


# ----------------------------------------------------------------------------
# Wrapper: PyTorch-layout conv -> pad/reshape (no extra transpose pass) -> pallas_call
# ----------------------------------------------------------------------------

def downsample2d(x_nchw, weight, bias):
    """Forward of nn.Conv2d(C, C, kernel_size=3, stride=2, padding=1).

    x_nchw: (B, Cin, H, W) f32, weight: (Cout, Cin, 3, 3) f32 (torch layout),
    bias: (Cout,) f32. Returns (B, Cout, Ho, Wo) f32.
    """
    B, Cin, H, W = x_nchw.shape
    Cout = weight.shape[0]
    Ho = (H - 1) // 2 + 1
    Wo = (W - 1) // 2 + 1
    Hh, Wh = Ho + 1, Wo + 1
    Hp, Wp = 2 * Hh, 2 * Wh

    # NCHW -> NHWC, zero pad (1 top/left, rest bottom/right), cast to bf16.
    x = jnp.transpose(x_nchw, (0, 2, 3, 1))
    x = jnp.pad(x, ((0, 0), (1, Hp - H - 1), (1, Wp - W - 1), (0, 0)))
    x = x.astype(jnp.bfloat16)
    # Free row-major dim split (no data movement): (B, Hp, Wp, Cin) -> (B, Hh, 2, Wh, 2*Cin)
    # so that x[b, hh, py, wh, px*Cin + c] == x_pad[b, 2*hh+py, 2*wh+px, c].
    x = x.reshape(B, Hh, 2, Wh, 2 * Cin)

    # (Cout, Cin, 3, 3) -> (9*Cin, Cout), rows ordered (dy, dx, cin) to match im2col.
    w = jnp.transpose(weight, (2, 3, 1, 0)).reshape(9 * Cin, Cout).astype(jnp.bfloat16)
    b = bias.reshape(1, Cout).astype(jnp.float32)

    # Cout tile: 256 fills the v6e/v7x MXU width, 128 is v5e-native, else full Cout.
    if Cout % 256 == 0:
        tn = 256
    elif Cout % 128 == 0:
        tn = 128
    else:
        tn = Cout
    n_tiles = Cout // tn

    M = B * Ho * Wo
    K = 9 * Cin

    # VMEM budget: double-buffered inputs/outputs + im2col scratch, 2x headroom,
    # clamped to <= 32 MiB (within every generation's physical VMEM, incl. v7x 64 MiB).
    need = 2 * (x.size * 2 + K * tn * 2 + tn * 4) + 2 * (M * tn * 4) + M * K * 2
    vmem_limit = int(min(max(2 * need, 16 * 1024 * 1024), 32 * 1024 * 1024))

    kernel = functools.partial(_conv3x3_s2_kernel, B=B, Ho=Ho, Wo=Wo, Cin=Cin)
    out = pl.pallas_call(
        kernel,
        out_shape=jax.ShapeDtypeStruct((M, Cout), jnp.float32),
        grid=(n_tiles,),
        in_specs=[
            # Constant block index -> activations DMA'd once for the whole grid.
            pl.BlockSpec((B, Hh, 2, Wh, 2 * Cin), lambda j: (0, 0, 0, 0, 0)),
            pl.BlockSpec((K, tn), lambda j: (0, j)),
            pl.BlockSpec((1, tn), lambda j: (0, j)),
        ],
        out_specs=pl.BlockSpec((M, tn), lambda j: (0, j)),
        scratch_shapes=[pltpu.VMEM((M, K), jnp.bfloat16)],
        compiler_params=pltpu.CompilerParams(
            dimension_semantics=("parallel",),
            vmem_limit_bytes=vmem_limit,
        ),
    )(x, w, b)

    # (B*Ho*Wo, Cout) -> NCHW (required by the PyTorch module's layout contract).
    out = out.reshape(B, Ho, Wo, Cout)
    return jnp.transpose(out, (0, 3, 1, 2))


# ----------------------------------------------------------------------------
# Main
# ----------------------------------------------------------------------------

if __name__ == "__main__":
    B, C, H, W = 2, 128, 16, 16

    key = jax.random.PRNGKey(0)
    kx, kw, kb = jax.random.split(key, 3)
    x = jax.random.normal(kx, (B, C, H, W), jnp.float32)
    weight = jax.random.normal(kw, (C, C, 3, 3), jnp.float32) * (1.0 / math.sqrt(9 * C))
    bias = jax.random.normal(kb, (C,), jnp.float32) * 0.01

    run = jax.jit(downsample2d)
    out = jax.block_until_ready(run(x, weight, bias))

    Ho = (H - 1) // 2 + 1
    Wo = (W - 1) // 2 + 1
    assert out.shape == (B, C, Ho, Wo), out.shape
    assert bool(jnp.all(jnp.isfinite(out)))

    # Reference check: XLA conv on bf16-rounded operands (kernel uses bf16 MXU
    # inputs with f32 accumulation, so only summation order differs).
    xq = x.astype(jnp.bfloat16).astype(jnp.float32)
    wq = weight.astype(jnp.bfloat16).astype(jnp.float32)
    ref = lax.conv_general_dilated(
        xq, wq, window_strides=(2, 2), padding=((1, 1), (1, 1)),
        dimension_numbers=("NCHW", "OIHW", "NCHW"),
        precision=lax.Precision.HIGHEST,
        preferred_element_type=jnp.float32,
    ) + bias[None, :, None, None]
    err = float(jnp.max(jnp.abs(out - ref)))
    assert err < 5e-2, err

    print("KERNEL_OK")
</pallas_src>

<mosaic_0001>
module attributes {stable_mosaic.version = 11 : i64} {
  func.func @_conv3x3_s2_kernel(%arg0: i32, %arg1: memref<2x9x2x9x256xbf16, #tpu.memory_space<vmem>>, %arg2: memref<1152x128xbf16, #tpu.memory_space<vmem>>, %arg3: memref<1x128xf32, #tpu.memory_space<vmem>>, %arg4: memref<128x128xf32, #tpu.memory_space<vmem>>, %arg5: memref<128x1152xbf16, #tpu.memory_space<vmem>>) attributes {dimension_semantics = [#tpu.dimension_semantics<parallel>], iteration_bounds = array<i64: 1>, scalar_prefetch = 0 : i64, scratch_operands = 1 : i64, tpu.core_type = #tpu.core_type<tc>, window_params = [{pipeline_mode = #tpu.pipeline_mode<synchronous>, transform_indices = @transform_0, window_bounds = array<i64: 2, 9, 2, 9, 256>}, {transform_indices = @transform_1, window_bounds = array<i64: 1152, 128>}, {transform_indices = @transform_2, window_bounds = array<i64: 1, 128>}, {transform_indices = @transform_3, window_bounds = array<i64: 128, 128>}]} {
    %c0 = arith.constant 0 : index
    %c0_0 = arith.constant 0 : index
    %c0_1 = arith.constant 0 : index
    %c0_2 = arith.constant 0 : index
    %c0_3 = arith.constant 0 : index
    %0 = vector.load %arg1[%c0, %c0_0, %c0_1, %c0_2, %c0_3] : memref<2x9x2x9x256xbf16, #tpu.memory_space<vmem>>, vector<2x8x1x8x128xbf16>
    %1 = vector.shape_cast %0 : vector<2x8x1x8x128xbf16> to vector<128x128xbf16>
    %c0_4 = arith.constant 0 : index
    %c0_5 = arith.constant 0 : index
    %2 = vector.load %arg5[%c0_4, %c0_5] : memref<128x1152xbf16, #tpu.memory_space<vmem>>, vector<128x128xbf16>
    tpu.vector_store %arg5[%c0_4, %c0_5], %1 {strides = array<i32>} : memref<128x1152xbf16, #tpu.memory_space<vmem>>, vector<128x128xbf16>,
    %c0_6 = arith.constant 0 : index
    %c0_7 = arith.constant 0 : index
    %c0_8 = arith.constant 0 : index
    %c0_9 = arith.constant 0 : index
    %c128 = arith.constant 128 : index
    %3 = vector.load %arg1[%c0_6, %c0_7, %c0_8, %c0_9, %c128] : memref<2x9x2x9x256xbf16, #tpu.memory_space<vmem>>, vector<2x8x1x8x128xbf16>
    %4 = vector.shape_cast %3 : vector<2x8x1x8x128xbf16> to vector<128x128xbf16>
    %c0_10 = arith.constant 0 : index
    %c128_11 = arith.constant 128 : index
    %5 = vector.load %arg5[%c0_10, %c128_11] : memref<128x1152xbf16, #tpu.memory_space<vmem>>, vector<128x128xbf16>
    tpu.vector_store %arg5[%c0_10, %c128_11], %4 {strides = array<i32>} : memref<128x1152xbf16, #tpu.memory_space<vmem>>, vector<128x128xbf16>,
    %c0_12 = arith.constant 0 : index
    %c0_13 = arith.constant 0 : index
    %c0_14 = arith.constant 0 : index
    %c1 = arith.constant 1 : index
    %c0_15 = arith.constant 0 : index
    %6 = vector.load %arg1[%c0_12, %c0_13, %c0_14, %c1, %c0_15] : memref<2x9x2x9x256xbf16, #tpu.memory_space<vmem>>, vector<2x8x1x8x128xbf16>
    %7 = vector.shape_cast %6 : vector<2x8x1x8x128xbf16> to vector<128x128xbf16>
    %c0_16 = arith.constant 0 : index
    %c256 = arith.constant 256 : index
    %8 = vector.load %arg5[%c0_16, %c256] : memref<128x1152xbf16, #tpu.memory_space<vmem>>, vector<128x128xbf16>
    tpu.vector_store %arg5[%c0_16, %c256], %7 {strides = array<i32>} : memref<128x1152xbf16, #tpu.memory_space<vmem>>, vector<128x128xbf16>,
    %c0_17 = arith.constant 0 : index
    %c0_18 = arith.constant 0 : index
    %c1_19 = arith.constant 1 : index
    %c0_20 = arith.constant 0 : index
    %c0_21 = arith.constant 0 : index
    %9 = vector.load %arg1[%c0_17, %c0_18, %c1_19, %c0_20, %c0_21] : memref<2x9x2x9x256xbf16, #tpu.memory_space<vmem>>, vector<2x8x1x8x128xbf16>
    %10 = vector.shape_cast %9 : vector<2x8x1x8x128xbf16> to vector<128x128xbf16>
    %c0_22 = arith.constant 0 : index
    %c384 = arith.constant 384 : index
    %11 = vector.load %arg5[%c0_22, %c384] : memref<128x1152xbf16, #tpu.memory_space<vmem>>, vector<128x128xbf16>
    tpu.vector_store %arg5[%c0_22, %c384], %10 {strides = array<i32>} : memref<128x1152xbf16, #tpu.memory_space<vmem>>, vector<128x128xbf16>,
    %c0_23 = arith.constant 0 : index
    %c0_24 = arith.constant 0 : index
    %c1_25 = arith.constant 1 : index
    %c0_26 = arith.constant 0 : index
    %c128_27 = arith.constant 128 : index
    %12 = vector.load %arg1[%c0_23, %c0_24, %c1_25, %c0_26, %c128_27] : memref<2x9x2x9x256xbf16, #tpu.memory_space<vmem>>, vector<2x8x1x8x128xbf16>
    %13 = vector.shape_cast %12 : vector<2x8x1x8x128xbf16> to vector<128x128xbf16>
    %c0_28 = arith.constant 0 : index
    %c512 = arith.constant 512 : index
    %14 = vector.load %arg5[%c0_28, %c512] : memref<128x1152xbf16, #tpu.memory_space<vmem>>, vector<128x128xbf16>
    tpu.vector_store %arg5[%c0_28, %c512], %13 {strides = array<i32>} : memref<128x1152xbf16, #tpu.memory_space<vmem>>, vector<128x128xbf16>,
    %c0_29 = arith.constant 0 : index
    %c0_30 = arith.constant 0 : index
    %c1_31 = arith.constant 1 : index
    %c1_32 = arith.constant 1 : index
    %c0_33 = arith.constant 0 : index
    %15 = vector.load %arg1[%c0_29, %c0_30, %c1_31, %c1_32, %c0_33] : memref<2x9x2x9x256xbf16, #tpu.memory_space<vmem>>, vector<2x8x1x8x128xbf16>
    %16 = vector.shape_cast %15 : vector<2x8x1x8x128xbf16> to vector<128x128xbf16>
    %c0_34 = arith.constant 0 : index
    %c640 = arith.constant 640 : index
    %17 = vector.load %arg5[%c0_34, %c640] : memref<128x1152xbf16, #tpu.memory_space<vmem>>, vector<128x128xbf16>
    tpu.vector_store %arg5[%c0_34, %c640], %16 {strides = array<i32>} : memref<128x1152xbf16, #tpu.memory_space<vmem>>, vector<128x128xbf16>,
    %c0_35 = arith.constant 0 : index
    %c1_36 = arith.constant 1 : index
    %c0_37 = arith.constant 0 : index
    %c0_38 = arith.constant 0 : index
    %c0_39 = arith.constant 0 : index
    %18 = vector.load %arg1[%c0_35, %c1_36, %c0_37, %c0_38, %c0_39] : memref<2x9x2x9x256xbf16, #tpu.memory_space<vmem>>, vector<2x8x1x8x128xbf16>
    %19 = vector.shape_cast %18 : vector<2x8x1x8x128xbf16> to vector<128x128xbf16>
    %c0_40 = arith.constant 0 : index
    %c768 = arith.constant 768 : index
    %20 = vector.load %arg5[%c0_40, %c768] : memref<128x1152xbf16, #tpu.memory_space<vmem>>, vector<128x128xbf16>
    tpu.vector_store %arg5[%c0_40, %c768], %19 {strides = array<i32>} : memref<128x1152xbf16, #tpu.memory_space<vmem>>, vector<128x128xbf16>,
    %c0_41 = arith.constant 0 : index
    %c1_42 = arith.constant 1 : index
    %c0_43 = arith.constant 0 : index
    %c0_44 = arith.constant 0 : index
    %c128_45 = arith.constant 128 : index
    %21 = vector.load %arg1[%c0_41, %c1_42, %c0_43, %c0_44, %c128_45] : memref<2x9x2x9x256xbf16, #tpu.memory_space<vmem>>, vector<2x8x1x8x128xbf16>
    %22 = vector.shape_cast %21 : vector<2x8x1x8x128xbf16> to vector<128x128xbf16>
    %c0_46 = arith.constant 0 : index
    %c896 = arith.constant 896 : index
    %23 = vector.load %arg5[%c0_46, %c896] : memref<128x1152xbf16, #tpu.memory_space<vmem>>, vector<128x128xbf16>
    tpu.vector_store %arg5[%c0_46, %c896], %22 {strides = array<i32>} : memref<128x1152xbf16, #tpu.memory_space<vmem>>, vector<128x128xbf16>,
    %c0_47 = arith.constant 0 : index
    %c1_48 = arith.constant 1 : index
    %c0_49 = arith.constant 0 : index
    %c1_50 = arith.constant 1 : index
    %c0_51 = arith.constant 0 : index
    %24 = vector.load %arg1[%c0_47, %c1_48, %c0_49, %c1_50, %c0_51] : memref<2x9x2x9x256xbf16, #tpu.memory_space<vmem>>, vector<2x8x1x8x128xbf16>
    %25 = vector.shape_cast %24 : vector<2x8x1x8x128xbf16> to vector<128x128xbf16>
    %c0_52 = arith.constant 0 : index
    %c1024 = arith.constant 1024 : index
    %26 = vector.load %arg5[%c0_52, %c1024] : memref<128x1152xbf16, #tpu.memory_space<vmem>>, vector<128x128xbf16>
    tpu.vector_store %arg5[%c0_52, %c1024], %25 {strides = array<i32>} : memref<128x1152xbf16, #tpu.memory_space<vmem>>, vector<128x128xbf16>,
    %c0_53 = arith.constant 0 : index
    %c0_54 = arith.constant 0 : index
    %27 = vector.load %arg5[%c0_53, %c0_54] : memref<128x1152xbf16, #tpu.memory_space<vmem>>, vector<128x1152xbf16>
    %c0_55 = arith.constant 0 : index
    %c0_56 = arith.constant 0 : index
    %28 = vector.load %arg2[%c0_55, %c0_56] : memref<1152x128xbf16, #tpu.memory_space<vmem>>, vector<1152x128xbf16>
    %cst = arith.constant dense<0.000000e+00> : vector<128x128xf32>
    %29 = tpu.matmul %27, %28, %cst {dimension_numbers = #tpu.dot_dimension_numbers<[1], [0], [0], [1], [0, 0, 1, 1], [], []>} : vector<128x1152xbf16>, vector<1152x128xbf16>, vector<128x128xf32> -> vector<128x128xf32>
    %c0_57 = arith.constant 0 : index
    %c0_58 = arith.constant 0 : index
    %30 = vector.load %arg3[%c0_57, %c0_58] : memref<1x128xf32, #tpu.memory_space<vmem>>, vector<1x128xf32>
    %31 = vector.broadcast %30 : vector<1x128xf32> to vector<128x128xf32>
    %32 = arith.addf %29, %31 : vector<128x128xf32>
    %c0_59 = arith.constant 0 : index
    %c0_60 = arith.constant 0 : index
    %33 = vector.load %arg4[%c0_59, %c0_60] : memref<128x128xf32, #tpu.memory_space<vmem>>, vector<128x128xf32>
    tpu.vector_store %arg4[%c0_59, %c0_60], %32 {strides = array<i32>} : memref<128x128xf32, #tpu.memory_space<vmem>>, vector<128x128xf32>,
    return
  }
  func.func @transform_0(%arg0: i32) -> (i32, i32, i32, i32, i32) {
    %c0_i32 = arith.constant 0 : i32
    %c0_i32_0 = arith.constant 0 : i32
    %c0_i32_1 = arith.constant 0 : i32
    %c0_i32_2 = arith.constant 0 : i32
    %c0_i32_3 = arith.constant 0 : i32
    %c0_i32_4 = arith.constant 0 : i32
    return %c0_i32, %c0_i32_0, %c0_i32_1, %c0_i32_2, %c0_i32_3 : i32, i32, i32, i32, i32
  }
  func.func @transform_1(%arg0: i32) -> (i32, i32) {
    %c0_i32 = arith.constant 0 : i32
    %c0_i32_0 = arith.constant 0 : i32
    return %c0_i32, %arg0 : i32, i32
  }
  func.func @transform_2(%arg0: i32) -> (i32, i32) {
    %c0_i32 = arith.constant 0 : i32
    %c0_i32_0 = arith.constant 0 : i32
    return %c0_i32, %arg0 : i32, i32
  }
  func.func @transform_3(%arg0: i32) -> (i32, i32) {
    %c0_i32 = arith.constant 0 : i32
    %c0_i32_0 = arith.constant 0 : i32
    return %c0_i32, %arg0 : i32, i32
  }
}

</mosaic_0001>

<llo_original>
// kernel: downsample2d.1
$region0: #{downsample2d.1}
  #allocation0 [shape = 'u32[]', space=smem, size = 0x4, offset = 0x4, fixed_abs, tag = 'smem constant byte address 0x4 - core index']
  #allocation1 [shape = 'u32[144,128]{1,0:T(1,128)}', space=vmem, size = 0x12000, scoped, tag = 'internal scratch']
  #allocation2 [shape = 'bf16[128,1152]{1,0:T(16,128)(2,1)}', space=vmem, size = 0x48000, scoped, tag = 'scratch operand']
  %s0 = inlined_call_operand.vmem [shape: bf16[2,9,2,9,256], index: 0, kind: input, shape index: {}]
  %s1 = inlined_call_operand.vmem [shape: bf16[1152,128], index: 1, kind: input, shape index: {}]
  %s2 = inlined_call_operand.vmem [shape: f32[1,128], index: 2, kind: input, shape index: {}]
  %s3 = inlined_call_operand.hbm [shape: f32[128,128], index: 3, kind: output, shape index: {}]
  %s4 = sld [smem:[#allocation0]]
  $region22: #{downsample2d.1} parent=0
    _
  %s6 = ssub.s32 1, %s4
  %s7 = scalar_select 0, %s6, %s4
  $region1: #{downsample2d.1} parent=0
    #allocation3 [shape = 'u8[65536]{0}', space=vmem, size = 0x10000, scoped, tag = 'output window, operand 0, single buffered']
    #allocation4 [shape = 's32[1]{0}', space=sflag, size = 0x4, scoped, tag = 'scoped memory for downsample2d.1']
    %8 = vsyncpa [#allocation4], 0
    // Predicated region
    $region2: #{downsample2d.1} parent=1 // pred_check
      _
    $region3: #{downsample2d.1} parent=1 // pred_check_branch
      %10 = sbr.rel (0) target = $region5
    $region4: #{downsample2d.1} parent=1 // pred_region
      _
    $region5: #{downsample2d.1} parent=1 // pred_fallthru
      _
    // Predicated region
    $region6: #{downsample2d.1} parent=1 // pred_check
      _
    $region7: #{downsample2d.1} parent=1 // pred_check_branch
      %12 = sbr.rel (0) target = $region9
    $region8: #{downsample2d.1} parent=1 // pred_region
      _
    $region9: #{downsample2d.1} parent=1 // pred_fallthru
      _
    // Predicated region
    $region10: #{downsample2d.1} parent=1 // pred_check
      _
    $region11: #{downsample2d.1} parent=1 // pred_check_branch
      %14 = sbr.rel (0) target = $region13
    $region12: #{downsample2d.1} parent=1 // pred_region
      _
    $region13: #{downsample2d.1} parent=1 // pred_fallthru
      _
    %v16 = vld [vmem:[%s0] sm:$0xf]
    %v17 = vld [vmem:[%s0 + $0x20] sm:$0xf]
    %v18 = vld [vmem:[%s0 + $0x40] sm:$0xf]
    %v19 = vld [vmem:[%s0 + $0x60] sm:$0xf]
    %v20 = vld [vmem:[%s0 + $0x80] sm:$0xf]
    %v21 = vld [vmem:[%s0 + $0xa0] sm:$0xf]
    %v22 = vld [vmem:[%s0 + $0xc0] sm:$0xf]
    %v23 = vld [vmem:[%s0 + $0xe0] sm:$0xf]
    %v24 = vld [vmem:[%s0 + $0x120] sm:$0xf]
    %v25 = vld [vmem:[%s0 + $0x140] sm:$0xf]
    %v26 = vld [vmem:[%s0 + $0x160] sm:$0xf]
    %v27 = vld [vmem:[%s0 + $0x180] sm:$0xf]
    %v28 = vld [vmem:[%s0 + $0x1a0] sm:$0xf]
    %v29 = vld [vmem:[%s0 + $0x1c0] sm:$0xf]
    %v30 = vld [vmem:[%s0 + $0x1e0] sm:$0xf]
    %v31 = vld [vmem:[%s0 + $0x200] sm:$0xf]
    %v48 = vunpack.c.l.b16 %v16
    %v49 = vunpack.c.l.b16 %v17
    %v50 = vunpack.c.l.b16 %v18
    %v51 = vunpack.c.l.b16 %v19
    %v52 = vunpack.c.l.b16 %v20
    %v53 = vunpack.c.l.b16 %v21
    %v54 = vunpack.c.l.b16 %v22
    %v55 = vunpack.c.l.b16 %v23
    %v56 = vunpack.c.l.b16 %v24
    %v57 = vunpack.c.l.b16 %v25
    %v58 = vunpack.c.l.b16 %v26
    %v59 = vunpack.c.l.b16 %v27
    %v60 = vunpack.c.l.b16 %v28
    %v61 = vunpack.c.l.b16 %v29
    %v62 = vunpack.c.l.b16 %v30
    %v63 = vunpack.c.l.b16 %v31
    %v64 = vpack.c.b16 %v49, %v48
    %v65 = vpack.c.b16 %v51, %v50
    %v66 = vpack.c.b16 %v53, %v52
    %v67 = vpack.c.b16 %v55, %v54
    %v68 = vpack.c.b16 %v57, %v56
    %v69 = vpack.c.b16 %v59, %v58
    %v70 = vpack.c.b16 %v61, %v60
    %v71 = vpack.c.b16 %v63, %v62
    %80 = vst [vmem:[#allocation2] sm:$0xff] %v64
    %81 = vst [vmem:[#allocation2 + $0x48] sm:$0xff] %v65
    %82 = vst [vmem:[#allocation2 + $0x90] sm:$0xff] %v66
    %83 = vst [vmem:[#allocation2 + $0xd8] sm:$0xff] %v67
    %84 = vst [vmem:[#allocation2 + $0x120] sm:$0xff] %v68
    %85 = vst [vmem:[#allocation2 + $0x168] sm:$0xff] %v69
    %86 = vst [vmem:[#allocation2 + $0x1b0] sm:$0xff] %v70
    %87 = vst [vmem:[#allocation2 + $0x1f8] sm:$0xff] %v71
    %v88 = vld [vmem:[%s0 + $0x4] sm:$0xf]
    %v89 = vld [vmem:[%s0 + $0x24] sm:$0xf]
    %v90 = vld [vmem:[%s0 + $0x44] sm:$0xf]
    %v91 = vld [vmem:[%s0 + $0x64] sm:$0xf]
    %v92 = vld [vmem:[%s0 + $0x84] sm:$0xf]
    %v93 = vld [vmem:[%s0 + $0xa4] sm:$0xf]
    %v94 = vld [vmem:[%s0 + $0xc4] sm:$0xf]
    %v95 = vld [vmem:[%s0 + $0xe4] sm:$0xf]
    %v96 = vld [vmem:[%s0 + $0x124] sm:$0xf]
    %v97 = vld [vmem:[%s0 + $0x144] sm:$0xf]
    %v98 = vld [vmem:[%s0 + $0x164] sm:$0xf]
    %v99 = vld [vmem:[%s0 + $0x184] sm:$0xf]
    %v100 = vld [vmem:[%s0 + $0x1a4] sm:$0xf]
    %v101 = vld [vmem:[%s0 + $0x1c4] sm:$0xf]
    %v102 = vld [vmem:[%s0 + $0x1e4] sm:$0xf]
    %v103 = vld [vmem:[%s0 + $0x204] sm:$0xf]
    %v120 = vunpack.c.l.b16 %v88
    %v121 = vunpack.c.l.b16 %v89
    %v122 = vunpack.c.l.b16 %v90
    %v123 = vunpack.c.l.b16 %v91
    %v124 = vunpack.c.l.b16 %v92
    %v125 = vunpack.c.l.b16 %v93
    %v126 = vunpack.c.l.b16 %v94
    %v127 = vunpack.c.l.b16 %v95
    %v128 = vunpack.c.l.b16 %v96
    %v129 = vunpack.c.l.b16 %v97
    %v130 = vunpack.c.l.b16 %v98
    %v131 = vunpack.c.l.b16 %v99
    %v132 = vunpack.c.l.b16 %v100
    %v133 = vunpack.c.l.b16 %v101
    %v134 = vunpack.c.l.b16 %v102
    %v135 = vunpack.c.l.b16 %v103
    %v136 = vpack.c.b16 %v121, %v120
    %v137 = vpack.c.b16 %v123, %v122
    %v138 = vpack.c.b16 %v125, %v124
    %v139 = vpack.c.b16 %v127, %v126
    %v140 = vpack.c.b16 %v129, %v128
    %v141 = vpack.c.b16 %v131, %v130
    %v142 = vpack.c.b16 %v133, %v132
    %v143 = vpack.c.b16 %v135, %v134
    %152 = vst [vmem:[#allocation2 + $0x8] sm:$0xff] %v136
    %153 = vst [vmem:[#allocation2 + $0x50] sm:$0xff] %v137
    %154 = vst [vmem:[#allocation2 + $0x98] sm:$0xff] %v138
    %155 = vst [vmem:[#allocation2 + $0xe0] sm:$0xff] %v139
    %156 = vst [vmem:[#allocation2 + $0x128] sm:$0xff] %v140
    %157 = vst [vmem:[#allocation2 + $0x170] sm:$0xff] %v141
    %158 = vst [vmem:[#allocation2 + $0x1b8] sm:$0xff] %v142
    %159 = vst [vmem:[#allocation2 + $0x200] sm:$0xff] %v143
    %v160 = vld [vmem:[%s0] sm:$0xf]
    %v161 = vld [vmem:[%s0 + $0x8] sm:$0x1]
    %v162 = vld [vmem:[%s0 + $0x20] sm:$0xf]
    %v163 = vld [vmem:[%s0 + $0x28] sm:$0x1]
    %v164 = vld [vmem:[%s0 + $0x40] sm:$0xf]
    %v165 = vld [vmem:[%s0 + $0x48] sm:$0x1]
    %v166 = vld [vmem:[%s0 + $0x60] sm:$0xf]
    %v167 = vld [vmem:[%s0 + $0x68] sm:$0x1]
    %v168 = vld [vmem:[%s0 + $0x80] sm:$0xf]
    %v169 = vld [vmem:[%s0 + $0x88] sm:$0x1]
    %v170 = vld [vmem:[%s0 + $0xa0] sm:$0xf]
    %v171 = vld [vmem:[%s0 + $0xa8] sm:$0x1]
    %v172 = vld [vmem:[%s0 + $0xc0] sm:$0xf]
    %v173 = vld [vmem:[%s0 + $0xc8] sm:$0x1]
    %v174 = vld [vmem:[%s0 + $0xe0] sm:$0xf]
    %v175 = vld [vmem:[%s0 + $0xe8] sm:$0x1]
    %v176 = vld [vmem:[%s0 + $0x120] sm:$0xf]
    %v177 = vld [vmem:[%s0 + $0x128] sm:$0x1]
    %v178 = vld [vmem:[%s0 + $0x140] sm:$0xf]
    %v179 = vld [vmem:[%s0 + $0x148] sm:$0x1]
    %v180 = vld [vmem:[%s0 + $0x160] sm:$0xf]
    %v181 = vld [vmem:[%s0 + $0x168] sm:$0x1]
    %v182 = vld [vmem:[%s0 + $0x180] sm:$0xf]
    %v183 = vld [vmem:[%s0 + $0x188] sm:$0x1]
    %v184 = vld [vmem:[%s0 + $0x1a0] sm:$0xf]
    %v185 = vld [vmem:[%s0 + $0x1a8] sm:$0x1]
    %v186 = vld [vmem:[%s0 + $0x1c0] sm:$0xf]
    %v187 = vld [vmem:[%s0 + $0x1c8] sm:$0x1]
    %v188 = vld [vmem:[%s0 + $0x1e0] sm:$0xf]
    %v189 = vld [vmem:[%s0 + $0x1e8] sm:$0x1]
    %v190 = vld [vmem:[%s0 + $0x200] sm:$0xf]
    %v191 = vld [vmem:[%s0 + $0x208] sm:$0x1]
    %vm192 = vsmask.f32 3328
    %vm193 = vsmask.f32 7440
    %vm194 = vmor %vm192, %vm193
    %v196 = vshrl.u32 %v160, 16
    %v198 = vrot.slane %v196, 4
    %v199 = vshll.u32 %v160, 16
    %v201 = vrot.slane %v199, 5
    %v202 = vor.u32 %v198, %v201
    %v203 = vrot.slane %v202, 4
    %v205 = vshll.u32 %v161, 16
    %v207 = vrot.slane %v205, 5
    %v208 = vsel %vm194, %v203, %v207
    %v210 = vshrl.u32 %v162, 16
    %v212 = vrot.slane %v210, 4
    %v213 = vshll.u32 %v162, 16
    %v215 = vrot.slane %v213, 5
    %v216 = vor.u32 %v212, %v215
    %v217 = vrot.slane %v216, 4
    %v219 = vshll.u32 %v163, 16
    %v221 = vrot.slane %v219, 5
    %v222 = vsel %vm194, %v217, %v221
    %v224 = vshrl.u32 %v164, 16
    %v226 = vrot.slane %v224, 4
    %v227 = vshll.u32 %v164, 16
    %v229 = vrot.slane %v227, 5
    %v230 = vor.u32 %v226, %v229
    %v231 = vrot.slane %v230, 4
    %v233 = vshll.u32 %v165, 16
    %v235 = vrot.slane %v233, 5
    %v236 = vsel %vm194, %v231, %v235
    %v238 = vshrl.u32 %v166, 16
    %v240 = vrot.slane %v238, 4
    %v241 = vshll.u32 %v166, 16
    %v243 = vrot.slane %v241, 5
    %v244 = vor.u32 %v240, %v243
    %v245 = vrot.slane %v244, 4
    %v247 = vshll.u32 %v167, 16
    %v249 = vrot.slane %v247, 5
    %v250 = vsel %vm194, %v245, %v249
    %v252 = vshrl.u32 %v168, 16
    %v254 = vrot.slane %v252, 4
    %v255 = vshll.u32 %v168, 16
    %v257 = vrot.slane %v255, 5
    %v258 = vor.u32 %v254, %v257
    %v259 = vrot.slane %v258, 4
    %v261 = vshll.u32 %v169, 16
    %v263 = vrot.slane %v261, 5
    %v264 = vsel %vm194, %v259, %v263
    %v266 = vshrl.u32 %v170, 16
    %v268 = vrot.slane %v266, 4
    %v269 = vshll.u32 %v170, 16
    %v271 = vrot.slane %v269, 5
    %v272 = vor.u32 %v268, %v271
    %v273 = vrot.slane %v272, 4
    %v275 = vshll.u32 %v171, 16
    %v277 = vrot.slane %v275, 5
    %v278 = vsel %vm194, %v273, %v277
    %v280 = vshrl.u32 %v172, 16
    %v282 = vrot.slane %v280, 4
    %v283 = vshll.u32 %v172, 16
    %v285 = vrot.slane %v283, 5
    %v286 = vor.u32 %v282, %v285
    %v287 = vrot.slane %v286, 4
    %v289 = vshll.u32 %v173, 16
    %v291 = vrot.slane %v289, 5
    %v292 = vsel %vm194, %v287, %v291
    %v294 = vshrl.u32 %v174, 16
    %v296 = vrot.slane %v294, 4
    %v297 = vshll.u32 %v174, 16
    %v299 = vrot.slane %v297, 5
    %v300 = vor.u32 %v296, %v299
    %v301 = vrot.slane %v300, 4
    %v303 = vshll.u32 %v175, 16
    %v305 = vrot.slane %v303, 5
    %v306 = vsel %vm194, %v301, %v305
    %v308 = vshrl.u32 %v176, 16
    %v310 = vrot.slane %v308, 4
    %v311 = vshll.u32 %v176, 16
    %v313 = vrot.slane %v311, 5
    %v314 = vor.u32 %v310, %v313
    %v315 = vrot.slane %v314, 4
    %v317 = vshll.u32 %v177, 16
    %v319 = vrot.slane %v317, 5
    %v320 = vsel %vm194, %v315, %v319
    %v322 = vshrl.u32 %v178, 16
    %v324 = vrot.slane %v322, 4
    %v325 = vshll.u32 %v178, 16
    %v327 = vrot.slane %v325, 5
    %v328 = vor.u32 %v324, %v327
    %v329 = vrot.slane %v328, 4
    %v331 = vshll.u32 %v179, 16
    %v333 = vrot.slane %v331, 5
    %v334 = vsel %vm194, %v329, %v333
    %v336 = vshrl.u32 %v180, 16
    %v338 = vrot.slane %v336, 4
    %v339 = vshll.u32 %v180, 16
    %v341 = vrot.slane %v339, 5
    %v342 = vor.u32 %v338, %v341
    %v343 = vrot.slane %v342, 4
    %v345 = vshll.u32 %v181, 16
    %v347 = vrot.slane %v345, 5
    %v348 = vsel %vm194, %v343, %v347
    %v350 = vshrl.u32 %v182, 16
    %v352 = vrot.slane %v350, 4
    %v353 = vshll.u32 %v182, 16
    %v355 = vrot.slane %v353, 5
    %v356 = vor.u32 %v352, %v355
    %v357 = vrot.slane %v356, 4
    %v359 = vshll.u32 %v183, 16
    %v361 = vrot.slane %v359, 5
    %v362 = vsel %vm194, %v357, %v361
    %v364 = vshrl.u32 %v184, 16
    %v366 = vrot.slane %v364, 4
    %v367 = vshll.u32 %v184, 16
    %v369 = vrot.slane %v367, 5
    %v370 = vor.u32 %v366, %v369
    %v371 = vrot.slane %v370, 4
    %v373 = vshll.u32 %v185, 16
    %v375 = vrot.slane %v373, 5
    %v376 = vsel %vm194, %v371, %v375
    %v378 = vshrl.u32 %v186, 16
    %v380 = vrot.slane %v378, 4
    %v381 = vshll.u32 %v186, 16
    %v383 = vrot.slane %v381, 5
    %v384 = vor.u32 %v380, %v383
    %v385 = vrot.slane %v384, 4
    %v387 = vshll.u32 %v187, 16
    %v389 = vrot.slane %v387, 5
    %v390 = vsel %vm194, %v385, %v389
    %v392 = vshrl.u32 %v188, 16
    %v394 = vrot.slane %v392, 4
    %v395 = vshll.u32 %v188, 16
    %v397 = vrot.slane %v395, 5
    %v398 = vor.u32 %v394, %v397
    %v399 = vrot.slane %v398, 4
    %v401 = vshll.u32 %v189, 16
    %v403 = vrot.slane %v401, 5
    %v404 = vsel %vm194, %v399, %v403
    %v406 = vshrl.u32 %v190, 16
    %v408 = vrot.slane %v406, 4
    %v409 = vshll.u32 %v190, 16
    %v411 = vrot.slane %v409, 5
    %v412 = vor.u32 %v408, %v411
    %v413 = vrot.slane %v412, 4
    %v415 = vshll.u32 %v191, 16
    %v417 = vrot.slane %v415, 5
    %v418 = vsel %vm194, %v413, %v417
    %v419 = vunpack.c.l.b16 %v208
    %v420 = vunpack.c.l.b16 %v222
    %v421 = vunpack.c.l.b16 %v236
    %v422 = vunpack.c.l.b16 %v250
    %v423 = vunpack.c.l.b16 %v264
    %v424 = vunpack.c.l.b16 %v278
    %v425 = vunpack.c.l.b16 %v292
    %v426 = vunpack.c.l.b16 %v306
    %v427 = vunpack.c.l.b16 %v320
    %v428 = vunpack.c.l.b16 %v334
    %v429 = vunpack.c.l.b16 %v348
    %v430 = vunpack.c.l.b16 %v362
    %v431 = vunpack.c.l.b16 %v376
    %v432 = vunpack.c.l.b16 %v390
    %v433 = vunpack.c.l.b16 %v404
    %v434 = vunpack.c.l.b16 %v418
    %v435 = vpack.c.b16 %v420, %v419
    %v436 = vpack.c.b16 %v422, %v421
    %v437 = vpack.c.b16 %v424, %v423
    %v438 = vpack.c.b16 %v426, %v425
    %v439 = vpack.c.b16 %v428, %v427
    %v440 = vpack.c.b16 %v430, %v429
    %v441 = vpack.c.b16 %v432, %v431
    %v442 = vpack.c.b16 %v434, %v433
    %451 = vst [vmem:[#allocation2 + $0x10] sm:$0xff] %v435
    %452 = vst [vmem:[#allocation2 + $0x58] sm:$0xff] %v436
    %453 = vst [vmem:[#allocation2 + $0xa0] sm:$0xff] %v437
    %454 = vst [vmem:[#allocation2 + $0xe8] sm:$0xff] %v438
    %455 = vst [vmem:[#allocation2 + $0x130] sm:$0xff] %v439
    %456 = vst [vmem:[#allocation2 + $0x178] sm:$0xff] %v440
    %457 = vst [vmem:[#allocation2 + $0x1c0] sm:$0xff] %v441
    %458 = vst [vmem:[#allocation2 + $0x208] sm:$0xff] %v442
    %s459 = scalar_lea.vmem %s0, 16
    %v460 = vld [vmem:[%s459] sm:$0xf]
    %v461 = vld [vmem:[%s459 + $0x20] sm:$0xf]
    %v462 = vld [vmem:[%s459 + $0x40] sm:$0xf]
    %v463 = vld [vmem:[%s459 + $0x60] sm:$0xf]
    %v464 = vld [vmem:[%s459 + $0x80] sm:$0xf]
    %v465 = vld [vmem:[%s459 + $0xa0] sm:$0xf]
    %v466 = vld [vmem:[%s459 + $0xc0] sm:$0xf]
    %v467 = vld [vmem:[%s459 + $0xe0] sm:$0xf]
    %v468 = vld [vmem:[%s459 + $0x120] sm:$0xf]
    %v469 = vld [vmem:[%s459 + $0x140] sm:$0xf]
    %v470 = vld [vmem:[%s459 + $0x160] sm:$0xf]
    %v471 = vld [vmem:[%s459 + $0x180] sm:$0xf]
    %v472 = vld [vmem:[%s459 + $0x1a0] sm:$0xf]
    %v473 = vld [vmem:[%s459 + $0x1c0] sm:$0xf]
    %v474 = vld [vmem:[%s459 + $0x1e0] sm:$0xf]
    %v475 = vld [vmem:[%s459 + $0x200] sm:$0xf]
    %v492 = vunpack.c.l.b16 %v460
    %v493 = vunpack.c.l.b16 %v461
    %v494 = vunpack.c.l.b16 %v462
    %v495 = vunpack.c.l.b16 %v463
    %v496 = vunpack.c.l.b16 %v464
    %v497 = vunpack.c.l.b16 %v465
    %v498 = vunpack.c.l.b16 %v466
    %v499 = vunpack.c.l.b16 %v467
    %v500 = vunpack.c.l.b16 %v468
    %v501 = vunpack.c.l.b16 %v469
    %v502 = vunpack.c.l.b16 %v470
    %v503 = vunpack.c.l.b16 %v471
    %v504 = vunpack.c.l.b16 %v472
    %v505 = vunpack.c.l.b16 %v473
    %v506 = vunpack.c.l.b16 %v474
    %v507 = vunpack.c.l.b16 %v475
    %v508 = vpack.c.b16 %v493, %v492
    %v509 = vpack.c.b16 %v495, %v494
    %v510 = vpack.c.b16 %v497, %v496
    %v511 = vpack.c.b16 %v499, %v498
    %v512 = vpack.c.b16 %v501, %v500
    %v513 = vpack.c.b16 %v503, %v502
    %v514 = vpack.c.b16 %v505, %v504
    %v515 = vpack.c.b16 %v507, %v506
    %524 = vst [vmem:[#allocation2 + $0x18] sm:$0xff] %v508
    %525 = vst [vmem:[#allocation2 + $0x60] sm:$0xff] %v509
    %526 = vst [vmem:[#allocation2 + $0xa8] sm:$0xff] %v510
    %527 = vst [vmem:[#allocation2 + $0xf0] sm:$0xff] %v511
    %528 = vst [vmem:[#allocation2 + $0x138] sm:$0xff] %v512
    %529 = vst [vmem:[#allocation2 + $0x180] sm:$0xff] %v513
    %530 = vst [vmem:[#allocation2 + $0x1c8] sm:$0xff] %v514
    %531 = vst [vmem:[#allocation2 + $0x210] sm:$0xff] %v515
    %v532 = vld [vmem:[%s459 + $0x4] sm:$0xf]
    %v533 = vld [vmem:[%s459 + $0x24] sm:$0xf]
    %v534 = vld [vmem:[%s459 + $0x44] sm:$0xf]
    %v535 = vld [vmem:[%s459 + $0x64] sm:$0xf]
    %v536 = vld [vmem:[%s459 + $0x84] sm:$0xf]
    %v537 = vld [vmem:[%s459 + $0xa4] sm:$0xf]
    %v538 = vld [vmem:[%s459 + $0xc4] sm:$0xf]
    %v539 = vld [vmem:[%s459 + $0xe4] sm:$0xf]
    %v540 = vld [vmem:[%s459 + $0x124] sm:$0xf]
    %v541 = vld [vmem:[%s459 + $0x144] sm:$0xf]
    %v542 = vld [vmem:[%s459 + $0x164] sm:$0xf]
    %v543 = vld [vmem:[%s459 + $0x184] sm:$0xf]
    %v544 = vld [vmem:[%s459 + $0x1a4] sm:$0xf]
    %v545 = vld [vmem:[%s459 + $0x1c4] sm:$0xf]
    %v546 = vld [vmem:[%s459 + $0x1e4] sm:$0xf]
    %v547 = vld [vmem:[%s459 + $0x204] sm:$0xf]
    %v564 = vunpack.c.l.b16 %v532
    %v565 = vunpack.c.l.b16 %v533
    %v566 = vunpack.c.l.b16 %v534
    %v567 = vunpack.c.l.b16 %v535
    %v568 = vunpack.c.l.b16 %v536
    %v569 = vunpack.c.l.b16 %v537
    %v570 = vunpack.c.l.b16 %v538
    %v571 = vunpack.c.l.b16 %v539
    %v572 = vunpack.c.l.b16 %v540
    %v573 = vunpack.c.l.b16 %v541
    %v574 = vunpack.c.l.b16 %v542
    %v575 = vunpack.c.l.b16 %v543
    %v576 = vunpack.c.l.b16 %v544
    %v577 = vunpack.c.l.b16 %v545
    %v578 = vunpack.c.l.b16 %v546
    %v579 = vunpack.c.l.b16 %v547
    %v580 = vpack.c.b16 %v565, %v564
    %v581 = vpack.c.b16 %v567, %v566
    %v582 = vpack.c.b16 %v569, %v568
    %v583 = vpack.c.b16 %v571, %v570
    %v584 = vpack.c.b16 %v573, %v572
    %v585 = vpack.c.b16 %v575, %v574
    %v586 = vpack.c.b16 %v577, %v576
    %v587 = vpack.c.b16 %v579, %v578
    %596 = vst [vmem:[#allocation2 + $0x20] sm:$0xff] %v580
    %597 = vst [vmem:[#allocation2 + $0x68] sm:$0xff] %v581
    %598 = vst [vmem:[#allocation2 + $0xb0] sm:$0xff] %v582
    %599 = vst [vmem:[#allocation2 + $0xf8] sm:$0xff] %v583
    %600 = vst [vmem:[#allocation2 + $0x140] sm:$0xff] %v584
    %601 = vst [vmem:[#allocation2 + $0x188] sm:$0xff] %v585
    %602 = vst [vmem:[#allocation2 + $0x1d0] sm:$0xff] %v586
    %603 = vst [vmem:[#allocation2 + $0x218] sm:$0xff] %v587
    %v604 = vld [vmem:[%s459] sm:$0xf]
    %v605 = vld [vmem:[%s459 + $0x8] sm:$0x1]
    %v606 = vld [vmem:[%s459 + $0x20] sm:$0xf]
    %v607 = vld [vmem:[%s459 + $0x28] sm:$0x1]
    %v608 = vld [vmem:[%s459 + $0x40] sm:$0xf]
    %v609 = vld [vmem:[%s459 + $0x48] sm:$0x1]
    %v610 = vld [vmem:[%s459 + $0x60] sm:$0xf]
    %v611 = vld [vmem:[%s459 + $0x68] sm:$0x1]
    %v612 = vld [vmem:[%s459 + $0x80] sm:$0xf]
    %v613 = vld [vmem:[%s459 + $0x88] sm:$0x1]
    %v614 = vld [vmem:[%s459 + $0xa0] sm:$0xf]
    %v615 = vld [vmem:[%s459 + $0xa8] sm:$0x1]
    %v616 = vld [vmem:[%s459 + $0xc0] sm:$0xf]
    %v617 = vld [vmem:[%s459 + $0xc8] sm:$0x1]
    %v618 = vld [vmem:[%s459 + $0xe0] sm:$0xf]
    %v619 = vld [vmem:[%s459 + $0xe8] sm:$0x1]
    %v620 = vld [vmem:[%s459 + $0x120] sm:$0xf]
    %v621 = vld [vmem:[%s459 + $0x128] sm:$0x1]
    %v622 = vld [vmem:[%s459 + $0x140] sm:$0xf]
    %v623 = vld [vmem:[%s459 + $0x148] sm:$0x1]
    %v624 = vld [vmem:[%s459 + $0x160] sm:$0xf]
    %v625 = vld [vmem:[%s459 + $0x168] sm:$0x1]
    %v626 = vld [vmem:[%s459 + $0x180] sm:$0xf]
    %v627 = vld [vmem:[%s459 + $0x188] sm:$0x1]
    %v628 = vld [vmem:[%s459 + $0x1a0] sm:$0xf]
    %v629 = vld [vmem:[%s459 + $0x1a8] sm:$0x1]
    %v630 = vld [vmem:[%s459 + $0x1c0] sm:$0xf]
    %v631 = vld [vmem:[%s459 + $0x1c8] sm:$0x1]
    %v632 = vld [vmem:[%s459 + $0x1e0] sm:$0xf]
    %v633 = vld [vmem:[%s459 + $0x1e8] sm:$0x1]
    %v634 = vld [vmem:[%s459 + $0x200] sm:$0xf]
    %v635 = vld [vmem:[%s459 + $0x208] sm:$0x1]
    %v637 = vshrl.u32 %v604, 16
    %v639 = vrot.slane %v637, 4
    %v640 = vshll.u32 %v604, 16
    %v642 = vrot.slane %v640, 5
    %v643 = vor.u32 %v639, %v642
    %v644 = vrot.slane %v643, 4
    %v646 = vshll.u32 %v605, 16
    %v648 = vrot.slane %v646, 5
    %v649 = vsel %vm194, %v644, %v648
    %v651 = vshrl.u32 %v606, 16
    %v653 = vrot.slane %v651, 4
    %v654 = vshll.u32 %v606, 16
    %v656 = vrot.slane %v654, 5
    %v657 = vor.u32 %v653, %v656
    %v658 = vrot.slane %v657, 4
    %v660 = vshll.u32 %v607, 16
    %v662 = vrot.slane %v660, 5
    %v663 = vsel %vm194, %v658, %v662
    %v665 = vshrl.u32 %v608, 16
    %v667 = vrot.slane %v665, 4
    %v668 = vshll.u32 %v608, 16
    %v670 = vrot.slane %v668, 5
    %v671 = vor.u32 %v667, %v670
    %v672 = vrot.slane %v671, 4
    %v674 = vshll.u32 %v609, 16
    %v676 = vrot.slane %v674, 5
    %v677 = vsel %vm194, %v672, %v676
    %v679 = vshrl.u32 %v610, 16
    %v681 = vrot.slane %v679, 4
    %v682 = vshll.u32 %v610, 16
    %v684 = vrot.slane %v682, 5
    %v685 = vor.u32 %v681, %v684
    %v686 = vrot.slane %v685, 4
    %v688 = vshll.u32 %v611, 16
    %v690 = vrot.slane %v688, 5
    %v691 = vsel %vm194, %v686, %v690
    %v693 = vshrl.u32 %v612, 16
    %v695 = vrot.slane %v693, 4
    %v696 = vshll.u32 %v612, 16
    %v698 = vrot.slane %v696, 5
    %v699 = vor.u32 %v695, %v698
    %v700 = vrot.slane %v699, 4
    %v702 = vshll.u32 %v613, 16
    %v704 = vrot.slane %v702, 5
    %v705 = vsel %vm194, %v700, %v704
    %v707 = vshrl.u32 %v614, 16
    %v709 = vrot.slane %v707, 4
    %v710 = vshll.u32 %v614, 16
    %v712 = vrot.slane %v710, 5
    %v713 = vor.u32 %v709, %v712
    %v714 = vrot.slane %v713, 4
    %v716 = vshll.u32 %v615, 16
    %v718 = vrot.slane %v716, 5
    %v719 = vsel %vm194, %v714, %v718
    %v721 = vshrl.u32 %v616, 16
    %v723 = vrot.slane %v721, 4
    %v724 = vshll.u32 %v616, 16
    %v726 = vrot.slane %v724, 5
    %v727 = vor.u32 %v723, %v726
    %v728 = vrot.slane %v727, 4
    %v730 = vshll.u32 %v617, 16
    %v732 = vrot.slane %v730, 5
    %v733 = vsel %vm194, %v728, %v732
    %v735 = vshrl.u32 %v618, 16
    %v737 = vrot.slane %v735, 4
    %v738 = vshll.u32 %v618, 16
    %v740 = vrot.slane %v738, 5
    %v741 = vor.u32 %v737, %v740
    %v742 = vrot.slane %v741, 4
    %v744 = vshll.u32 %v619, 16
    %v746 = vrot.slane %v744, 5
    %v747 = vsel %vm194, %v742, %v746
    %v749 = vshrl.u32 %v620, 16
    %v751 = vrot.slane %v749, 4
    %v752 = vshll.u32 %v620, 16
    %v754 = vrot.slane %v752, 5
    %v755 = vor.u32 %v751, %v754
    %v756 = vrot.slane %v755, 4
    %v758 = vshll.u32 %v621, 16
    %v760 = vrot.slane %v758, 5
    %v761 = vsel %vm194, %v756, %v760
    %v763 = vshrl.u32 %v622, 16
    %v765 = vrot.slane %v763, 4
    %v766 = vshll.u32 %v622, 16
    %v768 = vrot.slane %v766, 5
    %v769 = vor.u32 %v765, %v768
    %v770 = vrot.slane %v769, 4
    %v772 = vshll.u32 %v623, 16
    %v774 = vrot.slane %v772, 5
    %v775 = vsel %vm194, %v770, %v774
    %v777 = vshrl.u32 %v624, 16
    %v779 = vrot.slane %v777, 4
    %v780 = vshll.u32 %v624, 16
    %v782 = vrot.slane %v780, 5
    %v783 = vor.u32 %v779, %v782
    %v784 = vrot.slane %v783, 4
    %v786 = vshll.u32 %v625, 16
    %v788 = vrot.slane %v786, 5
    %v789 = vsel %vm194, %v784, %v788
    %v791 = vshrl.u32 %v626, 16
    %v793 = vrot.slane %v791, 4
    %v794 = vshll.u32 %v626, 16
    %v796 = vrot.slane %v794, 5
    %v797 = vor.u32 %v793, %v796
    %v798 = vrot.slane %v797, 4
    %v800 = vshll.u32 %v627, 16
    %v802 = vrot.slane %v800, 5
    %v803 = vsel %vm194, %v798, %v802
    %v805 = vshrl.u32 %v628, 16
    %v807 = vrot.slane %v805, 4
    %v808 = vshll.u32 %v628, 16
    %v810 = vrot.slane %v808, 5
    %v811 = vor.u32 %v807, %v810
    %v812 = vrot.slane %v811, 4
    %v814 = vshll.u32 %v629, 16
    %v816 = vrot.slane %v814, 5
    %v817 = vsel %vm194, %v812, %v816
    %v819 = vshrl.u32 %v630, 16
    %v821 = vrot.slane %v819, 4
    %v822 = vshll.u32 %v630, 16
    %v824 = vrot.slane %v822, 5
    %v825 = vor.u32 %v821, %v824
    %v826 = vrot.slane %v825, 4
    %v828 = vshll.u32 %v631, 16
    %v830 = vrot.slane %v828, 5
    %v831 = vsel %vm194, %v826, %v830
    %v833 = vshrl.u32 %v632, 16
    %v835 = vrot.slane %v833, 4
    %v836 = vshll.u32 %v632, 16
    %v838 = vrot.slane %v836, 5
    %v839 = vor.u32 %v835, %v838
    %v840 = vrot.slane %v839, 4
    %v842 = vshll.u32 %v633, 16
    %v844 = vrot.slane %v842, 5
    %v845 = vsel %vm194, %v840, %v844
    %v847 = vshrl.u32 %v634, 16
    %v849 = vrot.slane %v847, 4
    %v850 = vshll.u32 %v634, 16
    %v852 = vrot.slane %v850, 5
    %v853 = vor.u32 %v849, %v852
    %v854 = vrot.slane %v853, 4
    %v856 = vshll.u32 %v635, 16
    %v858 = vrot.slane %v856, 5
    %v859 = vsel %vm194, %v854, %v858
    %v860 = vunpack.c.l.b16 %v649
    %v861 = vunpack.c.l.b16 %v663
    %v862 = vunpack.c.l.b16 %v677
    %v863 = vunpack.c.l.b16 %v691
    %v864 = vunpack.c.l.b16 %v705
    %v865 = vunpack.c.l.b16 %v719
    %v866 = vunpack.c.l.b16 %v733
    %v867 = vunpack.c.l.b16 %v747
    %v868 = vunpack.c.l.b16 %v761
    %v869 = vunpack.c.l.b16 %v775
    %v870 = vunpack.c.l.b16 %v789
    %v871 = vunpack.c.l.b16 %v803
    %v872 = vunpack.c.l.b16 %v817
    %v873 = vunpack.c.l.b16 %v831
    %v874 = vunpack.c.l.b16 %v845
    %v875 = vunpack.c.l.b16 %v859
    %v876 = vpack.c.b16 %v861, %v860
    %v877 = vpack.c.b16 %v863, %v862
    %v878 = vpack.c.b16 %v865, %v864
    %v879 = vpack.c.b16 %v867, %v866
    %v880 = vpack.c.b16 %v869, %v868
    %v881 = vpack.c.b16 %v871, %v870
    %v882 = vpack.c.b16 %v873, %v872
    %v883 = vpack.c.b16 %v875, %v874
    %892 = vst [vmem:[#allocation2 + $0x28] sm:$0xff] %v876
    %893 = vst [vmem:[#allocation2 + $0x70] sm:$0xff] %v877
    %894 = vst [vmem:[#allocation2 + $0xb8] sm:$0xff] %v878
    %895 = vst [vmem:[#allocation2 + $0x100] sm:$0xff] %v879
    %896 = vst [vmem:[#allocation2 + $0x148] sm:$0xff] %v880
    %897 = vst [vmem:[#allocation2 + $0x190] sm:$0xff] %v881
    %898 = vst [vmem:[#allocation2 + $0x1d8] sm:$0xff] %v882
    %899 = vst [vmem:[#allocation2 + $0x220] sm:$0xff] %v883
    %s900 = scalar_lea.vmem %s0, 32
    %v901 = vld [vmem:[%s900] sm:$0xf]
    %v902 = vld [vmem:[%s900 + $0x20] sm:$0xf]
    %v903 = vld [vmem:[%s900 + $0x40] sm:$0xf]
    %v904 = vld [vmem:[%s900 + $0x60] sm:$0xf]
    %v905 = vld [vmem:[%s900 + $0x80] sm:$0xf]
    %v906 = vld [vmem:[%s900 + $0xa0] sm:$0xf]
    %v907 = vld [vmem:[%s900 + $0xc0] sm:$0xf]
    %v908 = vld [vmem:[%s900 + $0xe0] sm:$0xf]
    %v909 = vld [vmem:[%s900 + $0x120] sm:$0xf]
    %v910 = vld [vmem:[%s900 + $0x140] sm:$0xf]
    %v911 = vld [vmem:[%s900 + $0x160] sm:$0xf]
    %v912 = vld [vmem:[%s900 + $0x180] sm:$0xf]
    %v913 = vld [vmem:[%s900 + $0x1a0] sm:$0xf]
    %v914 = vld [vmem:[%s900 + $0x1c0] sm:$0xf]
    %v915 = vld [vmem:[%s900 + $0x1e0] sm:$0xf]
    %v916 = vld [vmem:[%s900 + $0x200] sm:$0xf]
    %v933 = vunpack.c.l.b16 %v901
    %v934 = vunpack.c.l.b16 %v902
    %v935 = vunpack.c.l.b16 %v903
    %v936 = vunpack.c.l.b16 %v904
    %v937 = vunpack.c.l.b16 %v905
    %v938 = vunpack.c.l.b16 %v906
    %v939 = vunpack.c.l.b16 %v907
    %v940 = vunpack.c.l.b16 %v908
    %v941 = vunpack.c.l.b16 %v909
    %v942 = vunpack.c.l.b16 %v910
    %v943 = vunpack.c.l.b16 %v911
    %v944 = vunpack.c.l.b16 %v912
    %v945 = vunpack.c.l.b16 %v913
    %v946 = vunpack.c.l.b16 %v914
    %v947 = vunpack.c.l.b16 %v915
    %v948 = vunpack.c.l.b16 %v916
    %v949 = vpack.c.b16 %v934, %v933
    %v950 = vpack.c.b16 %v936, %v935
    %v951 = vpack.c.b16 %v938, %v937
    %v952 = vpack.c.b16 %v940, %v939
    %v953 = vpack.c.b16 %v942, %v941
    %v954 = vpack.c.b16 %v944, %v943
    %v955 = vpack.c.b16 %v946, %v945
    %v956 = vpack.c.b16 %v948, %v947
    %965 = vst [vmem:[#allocation2 + $0x30] sm:$0xff] %v949
    %966 = vst [vmem:[#allocation2 + $0x78] sm:$0xff] %v950
    %967 = vst [vmem:[#allocation2 + $0xc0] sm:$0xff] %v951
    %968 = vst [vmem:[#allocation2 + $0x108] sm:$0xff] %v952
    %969 = vst [vmem:[#allocation2 + $0x150] sm:$0xff] %v953
    %970 = vst [vmem:[#allocation2 + $0x198] sm:$0xff] %v954
    %971 = vst [vmem:[#allocation2 + $0x1e0] sm:$0xff] %v955
    %972 = vst [vmem:[#allocation2 + $0x228] sm:$0xff] %v956
    %v973 = vld [vmem:[%s900 + $0x4] sm:$0xf]
    %v974 = vld [vmem:[%s900 + $0x24] sm:$0xf]
    %v975 = vld [vmem:[%s900 + $0x44] sm:$0xf]
    %v976 = vld [vmem:[%s900 + $0x64] sm:$0xf]
    %v977 = vld [vmem:[%s900 + $0x84] sm:$0xf]
    %v978 = vld [vmem:[%s900 + $0xa4] sm:$0xf]
    %v979 = vld [vmem:[%s900 + $0xc4] sm:$0xf]
    %v980 = vld [vmem:[%s900 + $0xe4] sm:$0xf]
    %v981 = vld [vmem:[%s900 + $0x124] sm:$0xf]
    %v982 = vld [vmem:[%s900 + $0x144] sm:$0xf]
    %v983 = vld [vmem:[%s900 + $0x164] sm:$0xf]
    %v984 = vld [vmem:[%s900 + $0x184] sm:$0xf]
    %v985 = vld [vmem:[%s900 + $0x1a4] sm:$0xf]
    %v986 = vld [vmem:[%s900 + $0x1c4] sm:$0xf]
    %v987 = vld [vmem:[%s900 + $0x1e4] sm:$0xf]
    %v988 = vld [vmem:[%s900 + $0x204] sm:$0xf]
    %v1005 = vunpack.c.l.b16 %v973
    %v1006 = vunpack.c.l.b16 %v974
    %v1007 = vunpack.c.l.b16 %v975
    %v1008 = vunpack.c.l.b16 %v976
    %v1009 = vunpack.c.l.b16 %v977
    %v1010 = vunpack.c.l.b16 %v978
    %v1011 = vunpack.c.l.b16 %v979
    %v1012 = vunpack.c.l.b16 %v980
    %v1013 = vunpack.c.l.b16 %v981
    %v1014 = vunpack.c.l.b16 %v982
    %v1015 = vunpack.c.l.b16 %v983
    %v1016 = vunpack.c.l.b16 %v984
    %v1017 = vunpack.c.l.b16 %v985
    %v1018 = vunpack.c.l.b16 %v986
    %v1019 = vunpack.c.l.b16 %v987
    %v1020 = vunpack.c.l.b16 %v988
    %v1021 = vpack.c.b16 %v1006, %v1005
    %v1022 = vpack.c.b16 %v1008, %v1007
    %v1023 = vpack.c.b16 %v1010, %v1009
    %v1024 = vpack.c.b16 %v1012, %v1011
    %v1025 = vpack.c.b16 %v1014, %v1013
    %v1026 = vpack.c.b16 %v1016, %v1015
    %v1027 = vpack.c.b16 %v1018, %v1017
    %v1028 = vpack.c.b16 %v1020, %v1019
    %1037 = vst [vmem:[#allocation2 + $0x38] sm:$0xff] %v1021
    %1038 = vst [vmem:[#allocation2 + $0x80] sm:$0xff] %v1022
    %1039 = vst [vmem:[#allocation2 + $0xc8] sm:$0xff] %v1023
    %1040 = vst [vmem:[#allocation2 + $0x110] sm:$0xff] %v1024
    %1041 = vst [vmem:[#allocation2 + $0x158] sm:$0xff] %v1025
    %1042 = vst [vmem:[#allocation2 + $0x1a0] sm:$0xff] %v1026
    %1043 = vst [vmem:[#allocation2 + $0x1e8] sm:$0xff] %v1027
    %1044 = vst [vmem:[#allocation2 + $0x230] sm:$0xff] %v1028
    %v1045 = vld [vmem:[%s900] sm:$0xf]
    %v1046 = vld [vmem:[%s900 + $0x8] sm:$0x1]
    %v1047 = vld [vmem:[%s900 + $0x20] sm:$0xf]
    %v1048 = vld [vmem:[%s900 + $0x28] sm:$0x1]
    %v1049 = vld [vmem:[%s900 + $0x40] sm:$0xf]
    %v1050 = vld [vmem:[%s900 + $0x48] sm:$0x1]
    %v1051 = vld [vmem:[%s900 + $0x60] sm:$0xf]
    %v1052 = vld [vmem:[%s900 + $0x68] sm:$0x1]
    %v1053 = vld [vmem:[%s900 + $0x80] sm:$0xf]
    %v1054 = vld [vmem:[%s900 + $0x88] sm:$0x1]
    %v1055 = vld [vmem:[%s900 + $0xa0] sm:$0xf]
    %v1056 = vld [vmem:[%s900 + $0xa8] sm:$0x1]
    %v1057 = vld [vmem:[%s900 + $0xc0] sm:$0xf]
    %v1058 = vld [vmem:[%s900 + $0xc8] sm:$0x1]
    %v1059 = vld [vmem:[%s900 + $0xe0] sm:$0xf]
    %v1060 = vld [vmem:[%s900 + $0xe8] sm:$0x1]
    %v1061 = vld [vmem:[%s900 + $0x120] sm:$0xf]
    %v1062 = vld [vmem:[%s900 + $0x128] sm:$0x1]
    %v1063 = vld [vmem:[%s900 + $0x140] sm:$0xf]
    %v1064 = vld [vmem:[%s900 + $0x148] sm:$0x1]
    %v1065 = vld [vmem:[%s900 + $0x160] sm:$0xf]
    %v1066 = vld [vmem:[%s900 + $0x168] sm:$0x1]
    %v1067 = vld [vmem:[%s900 + $0x180] sm:$0xf]
    %v1068 = vld [vmem:[%s900 + $0x188] sm:$0x1]
    %v1069 = vld [vmem:[%s900 + $0x1a0] sm:$0xf]
    %v1070 = vld [vmem:[%s900 + $0x1a8] sm:$0x1]
    %v1071 = vld [vmem:[%s900 + $0x1c0] sm:$0xf]
    %v1072 = vld [vmem:[%s900 + $0x1c8] sm:$0x1]
    %v1073 = vld [vmem:[%s900 + $0x1e0] sm:$0xf]
    %v1074 = vld [vmem:[%s900 + $0x1e8] sm:$0x1]
    %v1075 = vld [vmem:[%s900 + $0x200] sm:$0xf]
    %v1076 = vld [vmem:[%s900 + $0x208] sm:$0x1]
    %v1078 = vshrl.u32 %v1045, 16
    %v1080 = vrot.slane %v1078, 4
    %v1081 = vshll.u32 %v1045, 16
    %v1083 = vrot.slane %v1081, 5
    %v1084 = vor.u32 %v1080, %v1083
    %v1085 = vrot.slane %v1084, 4
    %v1087 = vshll.u32 %v1046, 16
    %v1089 = vrot.slane %v1087, 5
    %v1090 = vsel %vm194, %v1085, %v1089
    %v1092 = vshrl.u32 %v1047, 16
    %v1094 = vrot.slane %v1092, 4
    %v1095 = vshll.u32 %v1047, 16
    %v1097 = vrot.slane %v1095, 5
    %v1098 = vor.u32 %v1094, %v1097
    %v1099 = vrot.slane %v1098, 4
    %v1101 = vshll.u32 %v1048, 16
    %v1103 = vrot.slane %v1101, 5
    %v1104 = vsel %vm194, %v1099, %v1103
    %v1106 = vshrl.u32 %v1049, 16
    %v1108 = vrot.slane %v1106, 4
    %v1109 = vshll.u32 %v1049, 16
    %v1111 = vrot.slane %v1109, 5
    %v1112 = vor.u32 %v1108, %v1111
    %v1113 = vrot.slane %v1112, 4
    %v1115 = vshll.u32 %v1050, 16
    %v1117 = vrot.slane %v1115, 5
    %v1118 = vsel %vm194, %v1113, %v1117
    %v1120 = vshrl.u32 %v1051, 16
    %v1122 = vrot.slane %v1120, 4
    %v1123 = vshll.u32 %v1051, 16
    %v1125 = vrot.slane %v1123, 5
    %v1126 = vor.u32 %v1122, %v1125
    %v1127 = vrot.slane %v1126, 4
    %v1129 = vshll.u32 %v1052, 16
    %v1131 = vrot.slane %v1129, 5
    %v1132 = vsel %vm194, %v1127, %v1131
    %v1134 = vshrl.u32 %v1053, 16
    %v1136 = vrot.slane %v1134, 4
    %v1137 = vshll.u32 %v1053, 16
    %v1139 = vrot.slane %v1137, 5
    %v1140 = vor.u32 %v1136, %v1139
    %v1141 = vrot.slane %v1140, 4
    %v1143 = vshll.u32 %v1054, 16
    %v1145 = vrot.slane %v1143, 5
    %v1146 = vsel %vm194, %v1141, %v1145
    %v1148 = vshrl.u32 %v1055, 16
    %v1150 = vrot.slane %v1148, 4
    %v1151 = vshll.u32 %v1055, 16
    %v1153 = vrot.slane %v1151, 5
    %v1154 = vor.u32 %v1150, %v1153
    %v1155 = vrot.slane %v1154, 4
    %v1157 = vshll.u32 %v1056, 16
    %v1159 = vrot.slane %v1157, 5
    %v1160 = vsel %vm194, %v1155, %v1159
    %v1162 = vshrl.u32 %v1057, 16
    %v1164 = vrot.slane %v1162, 4
    %v1165 = vshll.u32 %v1057, 16
    %v1167 = vrot.slane %v1165, 5
    %v1168 = vor.u32 %v1164, %v1167
    %v1169 = vrot.slane %v1168, 4
    %v1171 = vshll.u32 %v1058, 16
    %v1173 = vrot.slane %v1171, 5
    %v1174 = vsel %vm194, %v1169, %v1173
    %v1176 = vshrl.u32 %v1059, 16
    %v1178 = vrot.slane %v1176, 4
    %v1179 = vshll.u32 %v1059, 16
    %v1181 = vrot.slane %v1179, 5
    %v1182 = vor.u32 %v1178, %v1181
    %v1183 = vrot.slane %v1182, 4
    %v1185 = vshll.u32 %v1060, 16
    %v1187 = vrot.slane %v1185, 5
    %v1188 = vsel %vm194, %v1183, %v1187
    %v1190 = vshrl.u32 %v1061, 16
    %v1192 = vrot.slane %v1190, 4
    %v1193 = vshll.u32 %v1061, 16
    %v1195 = vrot.slane %v1193, 5
    %v1196 = vor.u32 %v1192, %v1195
    %v1197 = vrot.slane %v1196, 4
    %v1199 = vshll.u32 %v1062, 16
    %v1201 = vrot.slane %v1199, 5
    %v1202 = vsel %vm194, %v1197, %v1201
    %v1204 = vshrl.u32 %v1063, 16
    %v1206 = vrot.slane %v1204, 4
    %v1207 = vshll.u32 %v1063, 16
    %v1209 = vrot.slane %v1207, 5
    %v1210 = vor.u32 %v1206, %v1209
    %v1211 = vrot.slane %v1210, 4
    %v1213 = vshll.u32 %v1064, 16
    %v1215 = vrot.slane %v1213, 5
    %v1216 = vsel %vm194, %v1211, %v1215
    %v1218 = vshrl.u32 %v1065, 16
    %v1220 = vrot.slane %v1218, 4
    %v1221 = vshll.u32 %v1065, 16
    %v1223 = vrot.slane %v1221, 5
    %v1224 = vor.u32 %v1220, %v1223
    %v1225 = vrot.slane %v1224, 4
    %v1227 = vshll.u32 %v1066, 16
    %v1229 = vrot.slane %v1227, 5
    %v1230 = vsel %vm194, %v1225, %v1229
    %v1232 = vshrl.u32 %v1067, 16
    %v1234 = vrot.slane %v1232, 4
    %v1235 = vshll.u32 %v1067, 16
    %v1237 = vrot.slane %v1235, 5
    %v1238 = vor.u32 %v1234, %v1237
    %v1239 = vrot.slane %v1238, 4
    %v1241 = vshll.u32 %v1068, 16
    %v1243 = vrot.slane %v1241, 5
    %v1244 = vsel %vm194, %v1239, %v1243
    %v1246 = vshrl.u32 %v1069, 16
    %v1248 = vrot.slane %v1246, 4
    %v1249 = vshll.u32 %v1069, 16
    %v1251 = vrot.slane %v1249, 5
    %v1252 = vor.u32 %v1248, %v1251
    %v1253 = vrot.slane %v1252, 4
    %v1255 = vshll.u32 %v1070, 16
    %v1257 = vrot.slane %v1255, 5
    %v1258 = vsel %vm194, %v1253, %v1257
    %v1260 = vshrl.u32 %v1071, 16
    %v1262 = vrot.slane %v1260, 4
    %v1263 = vshll.u32 %v1071, 16
    %v1265 = vrot.slane %v1263, 5
    %v1266 = vor.u32 %v1262, %v1265
    %v1267 = vrot.slane %v1266, 4
    %v1269 = vshll.u32 %v1072, 16
    %v1271 = vrot.slane %v1269, 5
    %v1272 = vsel %vm194, %v1267, %v1271
    %v1274 = vshrl.u32 %v1073, 16
    %v1276 = vrot.slane %v1274, 4
    %v1277 = vshll.u32 %v1073, 16
    %v1279 = vrot.slane %v1277, 5
    %v1280 = vor.u32 %v1276, %v1279
    %v1281 = vrot.slane %v1280, 4
    %v1283 = vshll.u32 %v1074, 16
    %v1285 = vrot.slane %v1283, 5
    %v1286 = vsel %vm194, %v1281, %v1285
    %v1288 = vshrl.u32 %v1075, 16
    %v1290 = vrot.slane %v1288, 4
    %v1291 = vshll.u32 %v1075, 16
    %v1293 = vrot.slane %v1291, 5
    %v1294 = vor.u32 %v1290, %v1293
    %v1295 = vrot.slane %v1294, 4
    %v1297 = vshll.u32 %v1076, 16
    %v1299 = vrot.slane %v1297, 5
    %v1300 = vsel %vm194, %v1295, %v1299
    %v1301 = vunpack.c.l.b16 %v1090
    %v1302 = vunpack.c.l.b16 %v1104
    %v1303 = vunpack.c.l.b16 %v1118
    %v1304 = vunpack.c.l.b16 %v1132
    %v1305 = vunpack.c.l.b16 %v1146
    %v1306 = vunpack.c.l.b16 %v1160
    %v1307 = vunpack.c.l.b16 %v1174
    %v1308 = vunpack.c.l.b16 %v1188
    %v1309 = vunpack.c.l.b16 %v1202
    %v1310 = vunpack.c.l.b16 %v1216
    %v1311 = vunpack.c.l.b16 %v1230
    %v1312 = vunpack.c.l.b16 %v1244
    %v1313 = vunpack.c.l.b16 %v1258
    %v1314 = vunpack.c.l.b16 %v1272
    %v1315 = vunpack.c.l.b16 %v1286
    %v1316 = vunpack.c.l.b16 %v1300
    %v1317 = vpack.c.b16 %v1302, %v1301
    %v1318 = vpack.c.b16 %v1304, %v1303
    %v1319 = vpack.c.b16 %v1306, %v1305
    %v1320 = vpack.c.b16 %v1308, %v1307
    %v1321 = vpack.c.b16 %v1310, %v1309
    %v1322 = vpack.c.b16 %v1312, %v1311
    %v1323 = vpack.c.b16 %v1314, %v1313
    %v1324 = vpack.c.b16 %v1316, %v1315
    %1333 = vst [vmem:[#allocation2 + $0x40] sm:$0xff] %v1317
    %1334 = vst [vmem:[#allocation2 + $0x88] sm:$0xff] %v1318
    %1335 = vst [vmem:[#allocation2 + $0xd0] sm:$0xff] %v1319
    %1336 = vst [vmem:[#allocation2 + $0x118] sm:$0xff] %v1320
    %1337 = vst [vmem:[#allocation2 + $0x160] sm:$0xff] %v1321
    %1338 = vst [vmem:[#allocation2 + $0x1a8] sm:$0xff] %v1322
    %1339 = vst [vmem:[#allocation2 + $0x1f0] sm:$0xff] %v1323
    %1340 = vst [vmem:[#allocation2 + $0x238] sm:$0xff] %v1324
    %v1341 = vld [vmem:[#allocation2] sm:$0xff]
    %v1342 = vld [vmem:[#allocation2 + $0x8] sm:$0xff]
    %v1343 = vld [vmem:[#allocation2 + $0x10] sm:$0xff]
    %v1344 = vld [vmem:[#allocation2 + $0x18] sm:$0xff]
    %v1345 = vld [vmem:[#allocation2 + $0x20] sm:$0xff]
    %v1346 = vld [vmem:[#allocation2 + $0x28] sm:$0xff]
    %v1347 = vld [vmem:[#allocation2 + $0x30] sm:$0xff]
    %v1348 = vld [vmem:[#allocation2 + $0x38] sm:$0xff]
    %v1349 = vld [vmem:[#allocation2 + $0x40] sm:$0xff]
    %v1350 = vld [vmem:[#allocation2 + $0x48] sm:$0xff]
    %v1351 = vld [vmem:[#allocation2 + $0x50] sm:$0xff]
    %v1352 = vld [vmem:[#allocation2 + $0x58] sm:$0xff]
    %v1353 = vld [vmem:[#allocation2 + $0x60] sm:$0xff]
    %v1354 = vld [vmem:[#allocation2 + $0x68] sm:$0xff]
    %v1355 = vld [vmem:[#allocation2 + $0x70] sm:$0xff]
    %v1356 = vld [vmem:[#allocation2 + $0x78] sm:$0xff]
    %v1357 = vld [vmem:[#allocation2 + $0x80] sm:$0xff]
    %v1358 = vld [vmem:[#allocation2 + $0x88] sm:$0xff]
    %v1359 = vld [vmem:[#allocation2 + $0x90] sm:$0xff]
    %v1360 = vld [vmem:[#allocation2 + $0x98] sm:$0xff]
    %v1361 = vld [vmem:[#allocation2 + $0xa0] sm:$0xff]
    %v1362 = vld [vmem:[#allocation2 + $0xa8] sm:$0xff]
    %v1363 = vld [vmem:[#allocation2 + $0xb0] sm:$0xff]
    %v1364 = vld [vmem:[#allocation2 + $0xb8] sm:$0xff]
    %v1365 = vld [vmem:[#allocation2 + $0xc0] sm:$0xff]
    %v1366 = vld [vmem:[#allocation2 + $0xc8] sm:$0xff]
    %v1367 = vld [vmem:[#allocation2 + $0xd0] sm:$0xff]
    %v1368 = vld [vmem:[#allocation2 + $0xd8] sm:$0xff]
    %v1369 = vld [vmem:[#allocation2 + $0xe0] sm:$0xff]
    %v1370 = vld [vmem:[#allocation2 + $0xe8] sm:$0xff]
    %v1371 = vld [vmem:[#allocation2 + $0xf0] sm:$0xff]
    %v1372 = vld [vmem:[#allocation2 + $0xf8] sm:$0xff]
    %v1373 = vld [vmem:[#allocation2 + $0x100] sm:$0xff]
    %v1374 = vld [vmem:[#allocation2 + $0x108] sm:$0xff]
    %v1375 = vld [vmem:[#allocation2 + $0x110] sm:$0xff]
    %v1376 = vld [vmem:[#allocation2 + $0x118] sm:$0xff]
    %v1377 = vld [vmem:[#allocation2 + $0x120] sm:$0xff]
    %v1378 = vld [vmem:[#allocation2 + $0x128] sm:$0xff]
    %v1379 = vld [vmem:[#allocation2 + $0x130] sm:$0xff]
    %v1380 = vld [vmem:[#allocation2 + $0x138] sm:$0xff]
    %v1381 = vld [vmem:[#allocation2 + $0x140] sm:$0xff]
    %v1382 = vld [vmem:[#allocation2 + $0x148] sm:$0xff]
    %v1383 = vld [vmem:[#allocation2 + $0x150] sm:$0xff]
    %v1384 = vld [vmem:[#allocation2 + $0x158] sm:$0xff]
    %v1385 = vld [vmem:[#allocation2 + $0x160] sm:$0xff]
    %v1386 = vld [vmem:[#allocation2 + $0x168] sm:$0xff]
    %v1387 = vld [vmem:[#allocation2 + $0x170] sm:$0xff]
    %v1388 = vld [vmem:[#allocation2 + $0x178] sm:$0xff]
    %v1389 = vld [vmem:[#allocation2 + $0x180] sm:$0xff]
    %v1390 = vld [vmem:[#allocation2 + $0x188] sm:$0xff]
    %v1391 = vld [vmem:[#allocation2 + $0x190] sm:$0xff]
    %v1392 = vld [vmem:[#allocation2 + $0x198] sm:$0xff]
    %v1393 = vld [vmem:[#allocation2 + $0x1a0] sm:$0xff]
    %v1394 = vld [vmem:[#allocation2 + $0x1a8] sm:$0xff]
    %v1395 = vld [vmem:[#allocation2 + $0x1b0] sm:$0xff]
    %v1396 = vld [vmem:[#allocation2 + $0x1b8] sm:$0xff]
    %v1397 = vld [vmem:[#allocation2 + $0x1c0] sm:$0xff]
    %v1398 = vld [vmem:[#allocation2 + $0x1c8] sm:$0xff]
    %v1399 = vld [vmem:[#allocation2 + $0x1d0] sm:$0xff]
    %v1400 = vld [vmem:[#allocation2 + $0x1d8] sm:$0xff]
    %v1401 = vld [vmem:[#allocation2 + $0x1e0] sm:$0xff]
    %v1402 = vld [vmem:[#allocation2 + $0x1e8] sm:$0xff]
    %v1403 = vld [vmem:[#allocation2 + $0x1f0] sm:$0xff]
    %v1404 = vld [vmem:[#allocation2 + $0x1f8] sm:$0xff]
    %v1405 = vld [vmem:[#allocation2 + $0x200] sm:$0xff]
    %v1406 = vld [vmem:[#allocation2 + $0x208] sm:$0xff]
    %v1407 = vld [vmem:[#allocation2 + $0x210] sm:$0xff]
    %v1408 = vld [vmem:[#allocation2 + $0x218] sm:$0xff]
    %v1409 = vld [vmem:[#allocation2 + $0x220] sm:$0xff]
    %v1410 = vld [vmem:[#allocation2 + $0x228] sm:$0xff]
    %v1411 = vld [vmem:[#allocation2 + $0x230] sm:$0xff]
    %v1412 = vld [vmem:[#allocation2 + $0x238] sm:$0xff]
    %v1413 = vld [vmem:[%s1] sm:$0xf]
    %v1414 = vld [vmem:[%s1 + $0x4] sm:$0xf]
    %v1415 = vld [vmem:[%s1 + $0x8] sm:$0xf]
    %v1416 = vld [vmem:[%s1 + $0xc] sm:$0xf]
    %v1417 = vld [vmem:[%s1 + $0x10] sm:$0xf]
    %v1418 = vld [vmem:[%s1 + $0x14] sm:$0xf]
    %v1419 = vld [vmem:[%s1 + $0x18] sm:$0xf]
    %v1420 = vld [vmem:[%s1 + $0x1c] sm:$0xf]
    %v1421 = vld [vmem:[%s1 + $0x20] sm:$0xf]
    %v1422 = vld [vmem:[%s1 + $0x24] sm:$0xf]
    %v1423 = vld [vmem:[%s1 + $0x28] sm:$0xf]
    %v1424 = vld [vmem:[%s1 + $0x2c] sm:$0xf]
    %v1425 = vld [vmem:[%s1 + $0x30] sm:$0xf]
    %v1426 = vld [vmem:[%s1 + $0x34] sm:$0xf]
    %v1427 = vld [vmem:[%s1 + $0x38] sm:$0xf]
    %v1428 = vld [vmem:[%s1 + $0x3c] sm:$0xf]
    %v1429 = vld [vmem:[%s1 + $0x40] sm:$0xf]
    %v1430 = vld [vmem:[%s1 + $0x44] sm:$0xf]
    %v1431 = vld [vmem:[%s1 + $0x48] sm:$0xf]
    %v1432 = vld [vmem:[%s1 + $0x4c] sm:$0xf]
    %v1433 = vld [vmem:[%s1 + $0x50] sm:$0xf]
    %v1434 = vld [vmem:[%s1 + $0x54] sm:$0xf]
    %v1435 = vld [vmem:[%s1 + $0x58] sm:$0xf]
    %v1436 = vld [vmem:[%s1 + $0x5c] sm:$0xf]
    %v1437 = vld [vmem:[%s1 + $0x60] sm:$0xf]
    %v1438 = vld [vmem:[%s1 + $0x64] sm:$0xf]
    %v1439 = vld [vmem:[%s1 + $0x68] sm:$0xf]
    %v1440 = vld [vmem:[%s1 + $0x6c] sm:$0xf]
    %v1441 = vld [vmem:[%s1 + $0x70] sm:$0xf]
    %v1442 = vld [vmem:[%s1 + $0x74] sm:$0xf]
    %v1443 = vld [vmem:[%s1 + $0x78] sm:$0xf]
    %v1444 = vld [vmem:[%s1 + $0x7c] sm:$0xf]
    %v1445 = vld [vmem:[%s1 + $0x80] sm:$0xf]
    %v1446 = vld [vmem:[%s1 + $0x84] sm:$0xf]
    %v1447 = vld [vmem:[%s1 + $0x88] sm:$0xf]
    %v1448 = vld [vmem:[%s1 + $0x8c] sm:$0xf]
    %v1449 = vld [vmem:[%s1 + $0x90] sm:$0xf]
    %v1450 = vld [vmem:[%s1 + $0x94] sm:$0xf]
    %v1451 = vld [vmem:[%s1 + $0x98] sm:$0xf]
    %v1452 = vld [vmem:[%s1 + $0x9c] sm:$0xf]
    %v1453 = vld [vmem:[%s1 + $0xa0] sm:$0xf]
    %v1454 = vld [vmem:[%s1 + $0xa4] sm:$0xf]
    %v1455 = vld [vmem:[%s1 + $0xa8] sm:$0xf]
    %v1456 = vld [vmem:[%s1 + $0xac] sm:$0xf]
    %v1457 = vld [vmem:[%s1 + $0xb0] sm:$0xf]
    %v1458 = vld [vmem:[%s1 + $0xb4] sm:$0xf]
    %v1459 = vld [vmem:[%s1 + $0xb8] sm:$0xf]
    %v1460 = vld [vmem:[%s1 + $0xbc] sm:$0xf]
    %v1461 = vld [vmem:[%s1 + $0xc0] sm:$0xf]
    %v1462 = vld [vmem:[%s1 + $0xc4] sm:$0xf]
    %v1463 = vld [vmem:[%s1 + $0xc8] sm:$0xf]
    %v1464 = vld [vmem:[%s1 + $0xcc] sm:$0xf]
    %v1465 = vld [vmem:[%s1 + $0xd0] sm:$0xf]
    %v1466 = vld [vmem:[%s1 + $0xd4] sm:$0xf]
    %v1467 = vld [vmem:[%s1 + $0xd8] sm:$0xf]
    %v1468 = vld [vmem:[%s1 + $0xdc] sm:$0xf]
    %v1469 = vld [vmem:[%s1 + $0xe0] sm:$0xf]
    %v1470 = vld [vmem:[%s1 + $0xe4] sm:$0xf]
    %v1471 = vld [vmem:[%s1 + $0xe8] sm:$0xf]
    %v1472 = vld [vmem:[%s1 + $0xec] sm:$0xf]
    %v1473 = vld [vmem:[%s1 + $0xf0] sm:$0xf]
    %v1474 = vld [vmem:[%s1 + $0xf4] sm:$0xf]
    %v1475 = vld [vmem:[%s1 + $0xf8] sm:$0xf]
    %v1476 = vld [vmem:[%s1 + $0xfc] sm:$0xf]
    %v1477 = vld [vmem:[%s1 + $0x100] sm:$0xf]
    %v1478 = vld [vmem:[%s1 + $0x104] sm:$0xf]
    %v1479 = vld [vmem:[%s1 + $0x108] sm:$0xf]
    %v1480 = vld [vmem:[%s1 + $0x10c] sm:$0xf]
    %v1481 = vld [vmem:[%s1 + $0x110] sm:$0xf]
    %v1482 = vld [vmem:[%s1 + $0x114] sm:$0xf]
    %v1483 = vld [vmem:[%s1 + $0x118] sm:$0xf]
    %v1484 = vld [vmem:[%s1 + $0x11c] sm:$0xf]
    %v1485 = vld [vmem:[%s1 + $0x120] sm:$0xf]
    %v1486 = vld [vmem:[%s1 + $0x124] sm:$0xf]
    %v1487 = vld [vmem:[%s1 + $0x128] sm:$0xf]
    %v1488 = vld [vmem:[%s1 + $0x12c] sm:$0xf]
    %v1489 = vld [vmem:[%s1 + $0x130] sm:$0xf]
    %v1490 = vld [vmem:[%s1 + $0x134] sm:$0xf]
    %v1491 = vld [vmem:[%s1 + $0x138] sm:$0xf]
    %v1492 = vld [vmem:[%s1 + $0x13c] sm:$0xf]
    %v1493 = vld [vmem:[%s1 + $0x140] sm:$0xf]
    %v1494 = vld [vmem:[%s1 + $0x144] sm:$0xf]
    %v1495 = vld [vmem:[%s1 + $0x148] sm:$0xf]
    %v1496 = vld [vmem:[%s1 + $0x14c] sm:$0xf]
    %v1497 = vld [vmem:[%s1 + $0x150] sm:$0xf]
    %v1498 = vld [vmem:[%s1 + $0x154] sm:$0xf]
    %v1499 = vld [vmem:[%s1 + $0x158] sm:$0xf]
    %v1500 = vld [vmem:[%s1 + $0x15c] sm:$0xf]
    %v1501 = vld [vmem:[%s1 + $0x160] sm:$0xf]
    %v1502 = vld [vmem:[%s1 + $0x164] sm:$0xf]
    %v1503 = vld [vmem:[%s1 + $0x168] sm:$0xf]
    %v1504 = vld [vmem:[%s1 + $0x16c] sm:$0xf]
    %v1505 = vld [vmem:[%s1 + $0x170] sm:$0xf]
    %v1506 = vld [vmem:[%s1 + $0x174] sm:$0xf]
    %v1507 = vld [vmem:[%s1 + $0x178] sm:$0xf]
    %v1508 = vld [vmem:[%s1 + $0x17c] sm:$0xf]
    %v1509 = vld [vmem:[%s1 + $0x180] sm:$0xf]
    %v1510 = vld [vmem:[%s1 + $0x184] sm:$0xf]
    %v1511 = vld [vmem:[%s1 + $0x188] sm:$0xf]
    %v1512 = vld [vmem:[%s1 + $0x18c] sm:$0xf]
    %v1513 = vld [vmem:[%s1 + $0x190] sm:$0xf]
    %v1514 = vld [vmem:[%s1 + $0x194] sm:$0xf]
    %v1515 = vld [vmem:[%s1 + $0x198] sm:$0xf]
    %v1516 = vld [vmem:[%s1 + $0x19c] sm:$0xf]
    %v1517 = vld [vmem:[%s1 + $0x1a0] sm:$0xf]
    %v1518 = vld [vmem:[%s1 + $0x1a4] sm:$0xf]
    %v1519 = vld [vmem:[%s1 + $0x1a8] sm:$0xf]
    %v1520 = vld [vmem:[%s1 + $0x1ac] sm:$0xf]
    %v1521 = vld [vmem:[%s1 + $0x1b0] sm:$0xf]
    %v1522 = vld [vmem:[%s1 + $0x1b4] sm:$0xf]
    %v1523 = vld [vmem:[%s1 + $0x1b8] sm:$0xf]
    %v1524 = vld [vmem:[%s1 + $0x1bc] sm:$0xf]
    %v1525 = vld [vmem:[%s1 + $0x1c0] sm:$0xf]
    %v1526 = vld [vmem:[%s1 + $0x1c4] sm:$0xf]
    %v1527 = vld [vmem:[%s1 + $0x1c8] sm:$0xf]
    %v1528 = vld [vmem:[%s1 + $0x1cc] sm:$0xf]
    %v1529 = vld [vmem:[%s1 + $0x1d0] sm:$0xf]
    %v1530 = vld [vmem:[%s1 + $0x1d4] sm:$0xf]
    %v1531 = vld [vmem:[%s1 + $0x1d8] sm:$0xf]
    %v1532 = vld [vmem:[%s1 + $0x1dc] sm:$0xf]
    %v1533 = vld [vmem:[%s1 + $0x1e0] sm:$0xf]
    %v1534 = vld [vmem:[%s1 + $0x1e4] sm:$0xf]
    %v1535 = vld [vmem:[%s1 + $0x1e8] sm:$0xf]
    %v1536 = vld [vmem:[%s1 + $0x1ec] sm:$0xf]
    %v1537 = vld [vmem:[%s1 + $0x1f0] sm:$0xf]
    %v1538 = vld [vmem:[%s1 + $0x1f4] sm:$0xf]
    %v1539 = vld [vmem:[%s1 + $0x1f8] sm:$0xf]
    %v1540 = vld [vmem:[%s1 + $0x1fc] sm:$0xf]
    %v1541 = vld [vmem:[%s1 + $0x200] sm:$0xf]
    %v1542 = vld [vmem:[%s1 + $0x204] sm:$0xf]
    %v1543 = vld [vmem:[%s1 + $0x208] sm:$0xf]
    %v1544 = vld [vmem:[%s1 + $0x20c] sm:$0xf]
    %v1545 = vld [vmem:[%s1 + $0x210] sm:$0xf]
    %v1546 = vld [vmem:[%s1 + $0x214] sm:$0xf]
    %v1547 = vld [vmem:[%s1 + $0x218] sm:$0xf]
    %v1548 = vld [vmem:[%s1 + $0x21c] sm:$0xf]
    %v1549 = vld [vmem:[%s1 + $0x220] sm:$0xf]
    %v1550 = vld [vmem:[%s1 + $0x224] sm:$0xf]
    %v1551 = vld [vmem:[%s1 + $0x228] sm:$0xf]
    %v1552 = vld [vmem:[%s1 + $0x22c] sm:$0xf]
    %v1553 = vld [vmem:[%s1 + $0x230] sm:$0xf]
    %v1554 = vld [vmem:[%s1 + $0x234] sm:$0xf]
    %v1555 = vld [vmem:[%s1 + $0x238] sm:$0xf]
    %v1556 = vld [vmem:[%s1 + $0x23c] sm:$0xf]
    %v1557 = vld [vmem:[%s2] sm:$0x1]
    %v1559 = vlaneseq
    %v1560 = vshrl.u32 %v1559, 7
    %v1561 = vsub.s32 0, %v1560
    %v1562 = vrot.slane %v1557, %v1561
    %v1708 = vunpack.c.l.b16 %v1413
    %v1709 = vunpack.c.l.b16 %v1414
    %v1710 = vunpack.c.l.b16 %v1415
    %v1711 = vunpack.c.l.b16 %v1416
    %v1712 = vunpack.c.l.b16 %v1417
    %v1713 = vunpack.c.l.b16 %v1418
    %v1714 = vunpack.c.l.b16 %v1419
    %v1715 = vunpack.c.l.b16 %v1420
    %v1716 = vunpack.c.l.b16 %v1421
    %v1717 = vunpack.c.l.b16 %v1422
    %v1718 = vunpack.c.l.b16 %v1423
    %v1719 = vunpack.c.l.b16 %v1424
    %v1720 = vunpack.c.l.b16 %v1425
    %v1721 = vunpack.c.l.b16 %v1426
    %v1722 = vunpack.c.l.b16 %v1427
    %v1723 = vunpack.c.l.b16 %v1428
    %v1724 = vunpack.c.l.b16 %v1429
    %v1725 = vunpack.c.l.b16 %v1430
    %v1726 = vunpack.c.l.b16 %v1431
    %v1727 = vunpack.c.l.b16 %v1432
    %v1728 = vunpack.c.l.b16 %v1433
    %v1729 = vunpack.c.l.b16 %v1434
    %v1730 = vunpack.c.l.b16 %v1435
    %v1731 = vunpack.c.l.b16 %v1436
    %v1732 = vunpack.c.l.b16 %v1437
    %v1733 = vunpack.c.l.b16 %v1438
    %v1734 = vunpack.c.l.b16 %v1439
    %v1735 = vunpack.c.l.b16 %v1440
    %v1736 = vunpack.c.l.b16 %v1441
    %v1737 = vunpack.c.l.b16 %v1442
    %v1738 = vunpack.c.l.b16 %v1443
    %v1739 = vunpack.c.l.b16 %v1444
    %v1740 = vunpack.c.l.b16 %v1445
    %v1741 = vunpack.c.l.b16 %v1446
    %v1742 = vunpack.c.l.b16 %v1447
    %v1743 = vunpack.c.l.b16 %v1448
    %v1744 = vunpack.c.l.b16 %v1449
    %v1745 = vunpack.c.l.b16 %v1450
    %v1746 = vunpack.c.l.b16 %v1451
    %v1747 = vunpack.c.l.b16 %v1452
    %v1748 = vunpack.c.l.b16 %v1453
    %v1749 = vunpack.c.l.b16 %v1454
    %v1750 = vunpack.c.l.b16 %v1455
    %v1751 = vunpack.c.l.b16 %v1456
    %v1752 = vunpack.c.l.b16 %v1457
    %v1753 = vunpack.c.l.b16 %v1458
    %v1754 = vunpack.c.l.b16 %v1459
    %v1755 = vunpack.c.l.b16 %v1460
    %v1756 = vunpack.c.l.b16 %v1461
    %v1757 = vunpack.c.l.b16 %v1462
    %v1758 = vunpack.c.l.b16 %v1463
    %v1759 = vunpack.c.l.b16 %v1464
    %v1760 = vunpack.c.l.b16 %v1465
    %v1761 = vunpack.c.l.b16 %v1466
    %v1762 = vunpack.c.l.b16 %v1467
    %v1763 = vunpack.c.l.b16 %v1468
    %v1764 = vunpack.c.l.b16 %v1469
    %v1765 = vunpack.c.l.b16 %v1470
    %v1766 = vunpack.c.l.b16 %v1471
    %v1767 = vunpack.c.l.b16 %v1472
    %v1768 = vunpack.c.l.b16 %v1473
    %v1769 = vunpack.c.l.b16 %v1474
    %v1770 = vunpack.c.l.b16 %v1475
    %v1771 = vunpack.c.l.b16 %v1476
    %v1772 = vunpack.c.l.b16 %v1477
    %v1773 = vunpack.c.l.b16 %v1478
    %v1774 = vunpack.c.l.b16 %v1479
    %v1775 = vunpack.c.l.b16 %v1480
    %v1776 = vunpack.c.l.b16 %v1481
    %v1777 = vunpack.c.l.b16 %v1482
    %v1778 = vunpack.c.l.b16 %v1483
    %v1779 = vunpack.c.l.b16 %v1484
    %v1780 = vunpack.c.l.b16 %v1485
    %v1781 = vunpack.c.l.b16 %v1486
    %v1782 = vunpack.c.l.b16 %v1487
    %v1783 = vunpack.c.l.b16 %v1488
    %v1784 = vunpack.c.l.b16 %v1489
    %v1785 = vunpack.c.l.b16 %v1490
    %v1786 = vunpack.c.l.b16 %v1491
    %v1787 = vunpack.c.l.b16 %v1492
    %v1788 = vunpack.c.l.b16 %v1493
    %v1789 = vunpack.c.l.b16 %v1494
    %v1790 = vunpack.c.l.b16 %v1495
    %v1791 = vunpack.c.l.b16 %v1496
    %v1792 = vunpack.c.l.b16 %v1497
    %v1793 = vunpack.c.l.b16 %v1498
    %v1794 = vunpack.c.l.b16 %v1499
    %v1795 = vunpack.c.l.b16 %v1500
    %v1796 = vunpack.c.l.b16 %v1501
    %v1797 = vunpack.c.l.b16 %v1502
    %v1798 = vunpack.c.l.b16 %v1503
    %v1799 = vunpack.c.l.b16 %v1504
    %v1800 = vunpack.c.l.b16 %v1505
    %v1801 = vunpack.c.l.b16 %v1506
    %v1802 = vunpack.c.l.b16 %v1507
    %v1803 = vunpack.c.l.b16 %v1508
    %v1804 = vunpack.c.l.b16 %v1509
    %v1805 = vunpack.c.l.b16 %v1510
    %v1806 = vunpack.c.l.b16 %v1511
    %v1807 = vunpack.c.l.b16 %v1512
    %v1808 = vunpack.c.l.b16 %v1513
    %v1809 = vunpack.c.l.b16 %v1514
    %v1810 = vunpack.c.l.b16 %v1515
    %v1811 = vunpack.c.l.b16 %v1516
    %v1812 = vunpack.c.l.b16 %v1517
    %v1813 = vunpack.c.l.b16 %v1518
    %v1814 = vunpack.c.l.b16 %v1519
    %v1815 = vunpack.c.l.b16 %v1520
    %v1816 = vunpack.c.l.b16 %v1521
    %v1817 = vunpack.c.l.b16 %v1522
    %v1818 = vunpack.c.l.b16 %v1523
    %v1819 = vunpack.c.l.b16 %v1524
    %v1820 = vunpack.c.l.b16 %v1525
    %v1821 = vunpack.c.l.b16 %v1526
    %v1822 = vunpack.c.l.b16 %v1527
    %v1823 = vunpack.c.l.b16 %v1528
    %v1824 = vunpack.c.l.b16 %v1529
    %v1825 = vunpack.c.l.b16 %v1530
    %v1826 = vunpack.c.l.b16 %v1531
    %v1827 = vunpack.c.l.b16 %v1532
    %v1828 = vunpack.c.l.b16 %v1533
    %v1829 = vunpack.c.l.b16 %v1534
    %v1830 = vunpack.c.l.b16 %v1535
    %v1831 = vunpack.c.l.b16 %v1536
    %v1832 = vunpack.c.l.b16 %v1537
    %v1833 = vunpack.c.l.b16 %v1538
    %v1834 = vunpack.c.l.b16 %v1539
    %v1835 = vunpack.c.l.b16 %v1540
    %v1836 = vunpack.c.l.b16 %v1541
    %v1837 = vunpack.c.l.b16 %v1542
    %v1838 = vunpack.c.l.b16 %v1543
    %v1839 = vunpack.c.l.b16 %v1544
    %v1840 = vunpack.c.l.b16 %v1545
    %v1841 = vunpack.c.l.b16 %v1546
    %v1842 = vunpack.c.l.b16 %v1547
    %v1843 = vunpack.c.l.b16 %v1548
    %v1844 = vunpack.c.l.b16 %v1549
    %v1845 = vunpack.c.l.b16 %v1550
    %v1846 = vunpack.c.l.b16 %v1551
    %v1847 = vunpack.c.l.b16 %v1552
    %v1848 = vunpack.c.l.b16 %v1553
    %v1849 = vunpack.c.l.b16 %v1554
    %v1850 = vunpack.c.l.b16 %v1555
    %v1851 = vunpack.c.l.b16 %v1556
    %v1852 = vpack.c.b16 %v1709, %v1708
    %v1853 = vpack.c.b16 %v1711, %v1710
    %v1854 = vpack.c.b16 %v1713, %v1712
    %v1855 = vpack.c.b16 %v1715, %v1714
    %v1856 = vpack.c.b16 %v1717, %v1716
    %v1857 = vpack.c.b16 %v1719, %v1718
    %v1858 = vpack.c.b16 %v1721, %v1720
    %v1859 = vpack.c.b16 %v1723, %v1722
    %v1860 = vpack.c.b16 %v1725, %v1724
    %v1861 = vpack.c.b16 %v1727, %v1726
    %v1862 = vpack.c.b16 %v1729, %v1728
    %v1863 = vpack.c.b16 %v1731, %v1730
    %v1864 = vpack.c.b16 %v1733, %v1732
    %v1865 = vpack.c.b16 %v1735, %v1734
    %v1866 = vpack.c.b16 %v1737, %v1736
    %v1867 = vpack.c.b16 %v1739, %v1738
    %v1868 = vpack.c.b16 %v1741, %v1740
    %v1869 = vpack.c.b16 %v1743, %v1742
    %v1870 = vpack.c.b16 %v1745, %v1744
    %v1871 = vpack.c.b16 %v1747, %v1746
    %v1872 = vpack.c.b16 %v1749, %v1748
    %v1873 = vpack.c.b16 %v1751, %v1750
    %v1874 = vpack.c.b16 %v1753, %v1752
    %v1875 = vpack.c.b16 %v1755, %v1754
    %v1876 = vpack.c.b16 %v1757, %v1756
    %v1877 = vpack.c.b16 %v1759, %v1758
    %v1878 = vpack.c.b16 %v1761, %v1760
    %v1879 = vpack.c.b16 %v1763, %v1762
    %v1880 = vpack.c.b16 %v1765, %v1764
    %v1881 = vpack.c.b16 %v1767, %v1766
    %v1882 = vpack.c.b16 %v1769, %v1768
    %v1883 = vpack.c.b16 %v1771, %v1770
    %v1884 = vpack.c.b16 %v1773, %v1772
    %v1885 = vpack.c.b16 %v1775, %v1774
    %v1886 = vpack.c.b16 %v1777, %v1776
    %v1887 = vpack.c.b16 %v1779, %v1778
    %v1888 = vpack.c.b16 %v1781, %v1780
    %v1889 = vpack.c.b16 %v1783, %v1782
    %v1890 = vpack.c.b16 %v1785, %v1784
    %v1891 = vpack.c.b16 %v1787, %v1786
    %v1892 = vpack.c.b16 %v1789, %v1788
    %v1893 = vpack.c.b16 %v1791, %v1790
    %v1894 = vpack.c.b16 %v1793, %v1792
    %v1895 = vpack.c.b16 %v1795, %v1794
    %v1896 = vpack.c.b16 %v1797, %v1796
    %v1897 = vpack.c.b16 %v1799, %v1798
    %v1898 = vpack.c.b16 %v1801, %v1800
    %v1899 = vpack.c.b16 %v1803, %v1802
    %v1900 = vpack.c.b16 %v1805, %v1804
    %v1901 = vpack.c.b16 %v1807, %v1806
    %v1902 = vpack.c.b16 %v1809, %v1808
    %v1903 = vpack.c.b16 %v1811, %v1810
    %v1904 = vpack.c.b16 %v1813, %v1812
    %v1905 = vpack.c.b16 %v1815, %v1814
    %v1906 = vpack.c.b16 %v1817, %v1816
    %v1907 = vpack.c.b16 %v1819, %v1818
    %v1908 = vpack.c.b16 %v1821, %v1820
    %v1909 = vpack.c.b16 %v1823, %v1822
    %v1910 = vpack.c.b16 %v1825, %v1824
    %v1911 = vpack.c.b16 %v1827, %v1826
    %v1912 = vpack.c.b16 %v1829, %v1828
    %v1913 = vpack.c.b16 %v1831, %v1830
    %v1914 = vpack.c.b16 %v1833, %v1832
    %v1915 = vpack.c.b16 %v1835, %v1834
    %v1916 = vpack.c.b16 %v1837, %v1836
    %v1917 = vpack.c.b16 %v1839, %v1838
    %v1918 = vpack.c.b16 %v1841, %v1840
    %v1919 = vpack.c.b16 %v1843, %v1842
    %v1920 = vpack.c.b16 %v1845, %v1844
    %v1921 = vpack.c.b16 %v1847, %v1846
    %v1922 = vpack.c.b16 %v1849, %v1848
    %v1923 = vpack.c.b16 %v1851, %v1850
    %1996 = vmatprep.subr.bf16.mxu0 0
    %1997 = vmatpush1.bf16.msra.mxu0 %v1852
    %1998 = vmatprep.subr.bf16.mxu0 0
    %1999 = vmatpush1.bf16.msra.mxu0 %v1853
    %2000 = vmatprep.subr.bf16.mxu0 0
    %2001 = vmatpush1.bf16.msra.mxu0 %v1854
    %2002 = vmatprep.subr.bf16.mxu0 0
    %2003 = vmatpush1.bf16.msra.mxu0 %v1855
    %2004 = vmatprep.subr.bf16.mxu0 0
    %2005 = vmatpush1.bf16.msra.mxu0 %v1856
    %2006 = vmatprep.subr.bf16.mxu0 0
    %2007 = vmatpush1.bf16.msra.mxu0 %v1857
    %2008 = vmatprep.subr.bf16.mxu0 0
    %2009 = vmatpush1.bf16.msra.mxu0 %v1858
    %2010 = vmatprep.subr.bf16.mxu0 0
    %2011 = vmatpush1.bf16.msra.mxu0 %v1859
    %2012 = vmatprep.subr.bf16.mxu0 0
    %2013 = vmatpush1.bf16.msra.mxu0 %v1860
    %2014 = vmatprep.subr.bf16.mxu0 0
    %2015 = vmatpush1.bf16.msra.mxu0 %v1861
    %2016 = vmatprep.subr.bf16.mxu0 0
    %2017 = vmatpush1.bf16.msra.mxu0 %v1862
    %2018 = vmatprep.subr.bf16.mxu0 0
    %2019 = vmatpush1.bf16.msra.mxu0 %v1863
    %2020 = vmatprep.subr.bf16.mxu0 0
    %2021 = vmatpush1.bf16.msra.mxu0 %v1864
    %2022 = vmatprep.subr.bf16.mxu0 0
    %2023 = vmatpush1.bf16.msra.mxu0 %v1865
    %2024 = vmatprep.subr.bf16.mxu0 0
    %2025 = vmatpush1.bf16.msra.mxu0 %v1866
    %2026 = vmatprep.subr.bf16.mxu0 0
    %2027 = vmatpush1.bf16.msra.mxu0 %v1867
    %2028 = vmatprep.mubr.bf16.mxu0 %v1342
    %2029 = vmatmul.mubr.bf16.gmra.mrb[0].mxu0 %v1341
    %v2030 = vpop.f32.mrb[0].mxu0
    %v2031 = vadd.f32 %v1562, %v2030
    %v2032 = vpop.f32.mrb[0].mxu0
    %v2033 = vpop.f32.mrb[0].mxu0
    %v2034 = vadd.f32 %v1562, %v2033
    %v2035 = vpop.f32.mrb[0].mxu0
    %2036 = vmatprep.mubr.bf16.mxu0 %v1351
    %2037 = vmatmul.mubr.bf16.gmra.mrb[0].mxu0 %v1350
    %v2038 = vpop.f32.mrb[0].mxu0
    %v2039 = vadd.f32 %v1562, %v2038
    %v2040 = vpop.f32.mrb[0].mxu0
    %v2041 = vpop.f32.mrb[0].mxu0
    %v2042 = vadd.f32 %v1562, %v2041
    %v2043 = vpop.f32.mrb[0].mxu0
    %2044 = vmatprep.mubr.bf16.mxu0 %v1360
    %2045 = vmatmul.mubr.bf16.gmra.mrb[0].mxu0 %v1359
    %v2046 = vpop.f32.mrb[0].mxu0
    %v2047 = vadd.f32 %v1562, %v2046
    %v2048 = vpop.f32.mrb[0].mxu0
    %v2049 = vpop.f32.mrb[0].mxu0
    %v2050 = vadd.f32 %v1562, %v2049
    %v2051 = vpop.f32.mrb[0].mxu0
    %2052 = vmatprep.mubr.bf16.mxu0 %v1369
    %2053 = vmatmul.mubr.bf16.gmra.mrb[0].mxu0 %v1368
    %v2054 = vpop.f32.mrb[0].mxu0
    %v2055 = vadd.f32 %v1562, %v2054
    %v2056 = vpop.f32.mrb[0].mxu0
    %v2057 = vpop.f32.mrb[0].mxu0
    %v2058 = vadd.f32 %v1562, %v2057
    %v2059 = vpop.f32.mrb[0].mxu0
    %2060 = vmatprep.mubr.bf16.mxu0 %v1378
    %2061 = vmatmul.mubr.bf16.gmra.mrb[0].mxu0 %v1377
    %v2062 = vpop.f32.mrb[0].mxu0
    %v2063 = vadd.f32 %v1562, %v2062
    %v2064 = vpop.f32.mrb[0].mxu0
    %v2065 = vpop.f32.mrb[0].mxu0
    %v2066 = vadd.f32 %v1562, %v2065
    %v2067 = vpop.f32.mrb[0].mxu0
    %2068 = vmatprep.mubr.bf16.mxu0 %v1387
    %2069 = vmatmul.mubr.bf16.gmra.mrb[0].mxu0 %v1386
    %v2070 = vpop.f32.mrb[0].mxu0
    %v2071 = vadd.f32 %v1562, %v2070
    %v2072 = vpop.f32.mrb[0].mxu0
    %v2073 = vpop.f32.mrb[0].mxu0
    %v2074 = vadd.f32 %v1562, %v2073
    %v2075 = vpop.f32.mrb[0].mxu0
    %2076 = vmatprep.mubr.bf16.mxu0 %v1396
    %2077 = vmatmul.mubr.bf16.gmra.mrb[0].mxu0 %v1395
    %v2078 = vpop.f32.mrb[0].mxu0
    %v2079 = vadd.f32 %v1562, %v2078
    %v2080 = vpop.f32.mrb[0].mxu0
    %v2081 = vpop.f32.mrb[0].mxu0
    %v2082 = vadd.f32 %v1562, %v2081
    %v2083 = vpop.f32.mrb[0].mxu0
    %2084 = vmatprep.mubr.bf16.mxu0 %v1405
    %2085 = vmatmul.mubr.bf16.gmra.mrb[0].mxu0 %v1404
    %v2086 = vpop.f32.mrb[0].mxu0
    %v2087 = vadd.f32 %v1562, %v2086
    %v2088 = vpop.f32.mrb[0].mxu0
    %v2089 = vpop.f32.mrb[0].mxu0
    %v2090 = vadd.f32 %v1562, %v2089
    %v2091 = vpop.f32.mrb[0].mxu0
    %2092 = vdwg.mxu0
    %2093 = vmatprep.subr.bf16.mxu0 0
    %2094 = vmatpush1.bf16.msra.mxu0 %v1868
    %2095 = vmatprep.subr.bf16.mxu0 0
    %2096 = vmatpush1.bf16.msra.mxu0 %v1869
    %2097 = vmatprep.subr.bf16.mxu0 0
    %2098 = vmatpush1.bf16.msra.mxu0 %v1870
    %2099 = vmatprep.subr.bf16.mxu0 0
    %2100 = vmatpush1.bf16.msra.mxu0 %v1871
    %2101 = vmatprep.subr.bf16.mxu0 0
    %2102 = vmatpush1.bf16.msra.mxu0 %v1872
    %2103 = vmatprep.subr.bf16.mxu0 0
    %2104 = vmatpush1.bf16.msra.mxu0 %v1873
    %2105 = vmatprep.subr.bf16.mxu0 0
    %2106 = vmatpush1.bf16.msra.mxu0 %v1874
    %2107 = vmatprep.subr.bf16.mxu0 0
    %2108 = vmatpush1.bf16.msra.mxu0 %v1875
    %2109 = vmatprep.subr.bf16.mxu0 0
    %2110 = vmatpush1.bf16.msra.mxu0 %v1876
    %2111 = vmatprep.subr.bf16.mxu0 0
    %2112 = vmatpush1.bf16.msra.mxu0 %v1877
    %2113 = vmatprep.subr.bf16.mxu0 0
    %2114 = vmatpush1.bf16.msra.mxu0 %v1878
    %2115 = vmatprep.subr.bf16.mxu0 0
    %2116 = vmatpush1.bf16.msra.mxu0 %v1879
    %2117 = vmatprep.subr.bf16.mxu0 0
    %2118 = vmatpush1.bf16.msra.mxu0 %v1880
    %2119 = vmatprep.subr.bf16.mxu0 0
    %2120 = vmatpush1.bf16.msra.mxu0 %v1881
    %2121 = vmatprep.subr.bf16.mxu0 0
    %2122 = vmatpush1.bf16.msra.mxu0 %v1882
    %2123 = vmatprep.subr.bf16.mxu0 0
    %2124 = vmatpush1.bf16.msra.mxu0 %v1883
    %2125 = vmatprep.mubr.bf16.mxu0 %v1344
    %2126 = vmatmul.mubr.bf16.gmra.mrb[0].mxu0 %v1343
    %v2127 = vpop.f32.mrb[0].mxu0
    %v2128 = vadd.f32 %v2031, %v2127
    %v2129 = vpop.f32.mrb[0].mxu0
    %v2130 = vpop.f32.mrb[0].mxu0
    %v2131 = vadd.f32 %v2034, %v2130
    %v2132 = vpop.f32.mrb[0].mxu0
    %2133 = vmatprep.mubr.bf16.mxu0 %v1353
    %2134 = vmatmul.mubr.bf16.gmra.mrb[0].mxu0 %v1352
    %v2135 = vpop.f32.mrb[0].mxu0
    %v2136 = vadd.f32 %v2039, %v2135
    %v2137 = vpop.f32.mrb[0].mxu0
    %v2138 = vpop.f32.mrb[0].mxu0
    %v2139 = vadd.f32 %v2042, %v2138
    %v2140 = vpop.f32.mrb[0].mxu0
    %2141 = vmatprep.mubr.bf16.mxu0 %v1362
    %2142 = vmatmul.mubr.bf16.gmra.mrb[0].mxu0 %v1361
    %v2143 = vpop.f32.mrb[0].mxu0
    %v2144 = vadd.f32 %v2047, %v2143
    %v2145 = vpop.f32.mrb[0].mxu0
    %v2146 = vpop.f32.mrb[0].mxu0
    %v2147 = vadd.f32 %v2050, %v2146
    %v2148 = vpop.f32.mrb[0].mxu0
    %2149 = vmatprep.mubr.bf16.mxu0 %v1371
    %2150 = vmatmul.mubr.bf16.gmra.mrb[0].mxu0 %v1370
    %v2151 = vpop.f32.mrb[0].mxu0
    %v2152 = vadd.f32 %v2055, %v2151
    %v2153 = vpop.f32.mrb[0].mxu0
    %v2154 = vpop.f32.mrb[0].mxu0
    %v2155 = vadd.f32 %v2058, %v2154
    %v2156 = vpop.f32.mrb[0].mxu0
    %2157 = vmatprep.mubr.bf16.mxu0 %v1380
    %2158 = vmatmul.mubr.bf16.gmra.mrb[0].mxu0 %v1379
    %v2159 = vpop.f32.mrb[0].mxu0
    %v2160 = vadd.f32 %v2063, %v2159
    %v2161 = vpop.f32.mrb[0].mxu0
    %v2162 = vpop.f32.mrb[0].mxu0
    %v2163 = vadd.f32 %v2066, %v2162
    %v2164 = vpop.f32.mrb[0].mxu0
    %2165 = vmatprep.mubr.bf16.mxu0 %v1389
    %2166 = vmatmul.mubr.bf16.gmra.mrb[0].mxu0 %v1388
    %v2167 = vpop.f32.mrb[0].mxu0
    %v2168 = vadd.f32 %v2071, %v2167
    %v2169 = vpop.f32.mrb[0].mxu0
    %v2170 = vpop.f32.mrb[0].mxu0
    %v2171 = vadd.f32 %v2074, %v2170
    %v2172 = vpop.f32.mrb[0].mxu0
    %2173 = vmatprep.mubr.bf16.mxu0 %v1398
    %2174 = vmatmul.mubr.bf16.gmra.mrb[0].mxu0 %v1397
    %v2175 = vpop.f32.mrb[0].mxu0
    %v2176 = vadd.f32 %v2079, %v2175
    %v2177 = vpop.f32.mrb[0].mxu0
    %v2178 = vpop.f32.mrb[0].mxu0
    %v2179 = vadd.f32 %v2082, %v2178
    %v2180 = vpop.f32.mrb[0].mxu0
    %2181 = vmatprep.mubr.bf16.mxu0 %v1407
    %2182 = vmatmul.mubr.bf16.gmra.mrb[0].mxu0 %v1406
    %v2183 = vpop.f32.mrb[0].mxu0
    %v2184 = vadd.f32 %v2087, %v2183
    %v2185 = vpop.f32.mrb[0].mxu0
    %v2186 = vpop.f32.mrb[0].mxu0
    %v2187 = vadd.f32 %v2090, %v2186
    %v2188 = vpop.f32.mrb[0].mxu0
    %2189 = vdwg.mxu0
    %2190 = vmatprep.subr.bf16.mxu0 0
    %2191 = vmatpush1.bf16.msra.mxu0 %v1884
    %2192 = vmatprep.subr.bf16.mxu0 0
    %2193 = vmatpush1.bf16.msra.mxu0 %v1885
    %2194 = vmatprep.subr.bf16.mxu0 0
    %2195 = vmatpush1.bf16.msra.mxu0 %v1886
    %2196 = vmatprep.subr.bf16.mxu0 0
    %2197 = vmatpush1.bf16.msra.mxu0 %v1887
    %2198 = vmatprep.subr.bf16.mxu0 0
    %2199 = vmatpush1.bf16.msra.mxu0 %v1888
    %2200 = vmatprep.subr.bf16.mxu0 0
    %2201 = vmatpush1.bf16.msra.mxu0 %v1889
    %2202 = vmatprep.subr.bf16.mxu0 0
    %2203 = vmatpush1.bf16.msra.mxu0 %v1890
    %2204 = vmatprep.subr.bf16.mxu0 0
    %2205 = vmatpush1.bf16.msra.mxu0 %v1891
    %2206 = vmatprep.subr.bf16.mxu0 0
    %2207 = vmatpush1.bf16.msra.mxu0 %v1892
    %2208 = vmatprep.subr.bf16.mxu0 0
    %2209 = vmatpush1.bf16.msra.mxu0 %v1893
    %2210 = vmatprep.subr.bf16.mxu0 0
    %2211 = vmatpush1.bf16.msra.mxu0 %v1894
    %2212 = vmatprep.subr.bf16.mxu0 0
    %2213 = vmatpush1.bf16.msra.mxu0 %v1895
    %2214 = vmatprep.subr.bf16.mxu0 0
    %2215 = vmatpush1.bf16.msra.mxu0 %v1896
    %2216 = vmatprep.subr.bf16.mxu0 0
    %2217 = vmatpush1.bf16.msra.mxu0 %v1897
    %2218 = vmatprep.subr.bf16.mxu0 0
    %2219 = vmatpush1.bf16.msra.mxu0 %v1898
    %2220 = vmatprep.subr.bf16.mxu0 0
    %2221 = vmatpush1.bf16.msra.mxu0 %v1899
    %2222 = vmatprep.mubr.bf16.mxu0 %v1346
    %2223 = vmatmul.mubr.bf16.gmra.mrb[0].mxu0 %v1345
    %v2224 = vpop.f32.mrb[0].mxu0
    %v2225 = vadd.f32 %v2128, %v2224
    %v2226 = vpop.f32.mrb[0].mxu0
    %v2227 = vpop.f32.mrb[0].mxu0
    %v2228 = vadd.f32 %v2131, %v2227
    %v2229 = vpop.f32.mrb[0].mxu0
    %2230 = vmatprep.mubr.bf16.mxu0 %v1355
    %2231 = vmatmul.mubr.bf16.gmra.mrb[0].mxu0 %v1354
    %v2232 = vpop.f32.mrb[0].mxu0
    %v2233 = vadd.f32 %v2136, %v2232
    %v2234 = vpop.f32.mrb[0].mxu0
    %v2235 = vpop.f32.mrb[0].mxu0
    %v2236 = vadd.f32 %v2139, %v2235
    %v2237 = vpop.f32.mrb[0].mxu0
    %2238 = vmatprep.mubr.bf16.mxu0 %v1364
    %2239 = vmatmul.mubr.bf16.gmra.mrb[0].mxu0 %v1363
    %v2240 = vpop.f32.mrb[0].mxu0
    %v2241 = vadd.f32 %v2144, %v2240
    %v2242 = vpop.f32.mrb[0].mxu0
    %v2243 = vpop.f32.mrb[0].mxu0
    %v2244 = vadd.f32 %v2147, %v2243
    %v2245 = vpop.f32.mrb[0].mxu0
    %2246 = vmatprep.mubr.bf16.mxu0 %v1373
    %2247 = vmatmul.mubr.bf16.gmra.mrb[0].mxu0 %v1372
    %v2248 = vpop.f32.mrb[0].mxu0
    %v2249 = vadd.f32 %v2152, %v2248
    %v2250 = vpop.f32.mrb[0].mxu0
    %v2251 = vpop.f32.mrb[0].mxu0
    %v2252 = vadd.f32 %v2155, %v2251
    %v2253 = vpop.f32.mrb[0].mxu0
    %2254 = vmatprep.mubr.bf16.mxu0 %v1382
    %2255 = vmatmul.mubr.bf16.gmra.mrb[0].mxu0 %v1381
    %v2256 = vpop.f32.mrb[0].mxu0
    %v2257 = vadd.f32 %v2160, %v2256
    %v2258 = vpop.f32.mrb[0].mxu0
    %v2259 = vpop.f32.mrb[0].mxu0
    %v2260 = vadd.f32 %v2163, %v2259
    %v2261 = vpop.f32.mrb[0].mxu0
    %2262 = vmatprep.mubr.bf16.mxu0 %v1391
    %2263 = vmatmul.mubr.bf16.gmra.mrb[0].mxu0 %v1390
    %v2264 = vpop.f32.mrb[0].mxu0
    %v2265 = vadd.f32 %v2168, %v2264
    %v2266 = vpop.f32.mrb[0].mxu0
    %v2267 = vpop.f32.mrb[0].mxu0
    %v2268 = vadd.f32 %v2171, %v2267
    %v2269 = vpop.f32.mrb[0].mxu0
    %2270 = vmatprep.mubr.bf16.mxu0 %v1400
    %2271 = vmatmul.mubr.bf16.gmra.mrb[0].mxu0 %v1399
    %v2272 = vpop.f32.mrb[0].mxu0
    %v2273 = vadd.f32 %v2176, %v2272
    %v2274 = vpop.f32.mrb[0].mxu0
    %v2275 = vpop.f32.mrb[0].mxu0
    %v2276 = vadd.f32 %v2179, %v2275
    %v2277 = vpop.f32.mrb[0].mxu0
    %2278 = vmatprep.mubr.bf16.mxu0 %v1409
    %2279 = vmatmul.mubr.bf16.gmra.mrb[0].mxu0 %v1408
    %v2280 = vpop.f32.mrb[0].mxu0
    %v2281 = vadd.f32 %v2184, %v2280
    %v2282 = vpop.f32.mrb[0].mxu0
    %v2283 = vpop.f32.mrb[0].mxu0
    %v2284 = vadd.f32 %v2187, %v2283
    %v2285 = vpop.f32.mrb[0].mxu0
    %2286 = vdwg.mxu0
    %2287 = vmatprep.subr.bf16.mxu0 0
    %2288 = vmatpush1.bf16.msra.mxu0 %v1900
    %2289 = vmatprep.subr.bf16.mxu0 0
    %2290 = vmatpush1.bf16.msra.mxu0 %v1901
    %2291 = vmatprep.subr.bf16.mxu0 0
    %2292 = vmatpush1.bf16.msra.mxu0 %v1902
    %2293 = vmatprep.subr.bf16.mxu0 0
    %2294 = vmatpush1.bf16.msra.mxu0 %v1903
    %2295 = vmatprep.subr.bf16.mxu0 0
    %2296 = vmatpush1.bf16.msra.mxu0 %v1904
    %2297 = vmatprep.subr.bf16.mxu0 0
    %2298 = vmatpush1.bf16.msra.mxu0 %v1905
    %2299 = vmatprep.subr.bf16.mxu0 0
    %2300 = vmatpush1.bf16.msra.mxu0 %v1906
    %2301 = vmatprep.subr.bf16.mxu0 0
    %2302 = vmatpush1.bf16.msra.mxu0 %v1907
    %2303 = vmatprep.subr.bf16.mxu0 0
    %2304 = vmatpush1.bf16.msra.mxu0 %v1908
    %2305 = vmatprep.subr.bf16.mxu0 0
    %2306 = vmatpush1.bf16.msra.mxu0 %v1909
    %2307 = vmatprep.subr.bf16.mxu0 0
    %2308 = vmatpush1.bf16.msra.mxu0 %v1910
    %2309 = vmatprep.subr.bf16.mxu0 0
    %2310 = vmatpush1.bf16.msra.mxu0 %v1911
    %2311 = vmatprep.subr.bf16.mxu0 0
    %2312 = vmatpush1.bf16.msra.mxu0 %v1912
    %2313 = vmatprep.subr.bf16.mxu0 0
    %2314 = vmatpush1.bf16.msra.mxu0 %v1913
    %2315 = vmatprep.subr.bf16.mxu0 0
    %2316 = vmatpush1.bf16.msra.mxu0 %v1914
    %2317 = vmatprep.subr.bf16.mxu0 0
    %2318 = vmatpush1.bf16.msra.mxu0 %v1915
    %2319 = vmatprep.mubr.bf16.mxu0 %v1348
    %2320 = vmatmul.mubr.bf16.gmra.mrb[0].mxu0 %v1347
    %v2321 = vpop.f32.mrb[0].mxu0
    %v2322 = vadd.f32 %v2225, %v2321
    %v2323 = vpop.f32.mrb[0].mxu0
    %v2324 = vpop.f32.mrb[0].mxu0
    %v2325 = vadd.f32 %v2228, %v2324
    %v2326 = vpop.f32.mrb[0].mxu0
    %2327 = vmatprep.mubr.bf16.mxu0 %v1357
    %2328 = vmatmul.mubr.bf16.gmra.mrb[0].mxu0 %v1356
    %v2329 = vpop.f32.mrb[0].mxu0
    %v2330 = vadd.f32 %v2233, %v2329
    %v2331 = vpop.f32.mrb[0].mxu0
    %v2332 = vpop.f32.mrb[0].mxu0
    %v2333 = vadd.f32 %v2236, %v2332
    %v2334 = vpop.f32.mrb[0].mxu0
    %2335 = vmatprep.mubr.bf16.mxu0 %v1366
    %2336 = vmatmul.mubr.bf16.gmra.mrb[0].mxu0 %v1365
    %v2337 = vpop.f32.mrb[0].mxu0
    %v2338 = vadd.f32 %v2241, %v2337
    %v2339 = vpop.f32.mrb[0].mxu0
    %v2340 = vpop.f32.mrb[0].mxu0
    %v2341 = vadd.f32 %v2244, %v2340
    %v2342 = vpop.f32.mrb[0].mxu0
    %2343 = vmatprep.mubr.bf16.mxu0 %v1375
    %2344 = vmatmul.mubr.bf16.gmra.mrb[0].mxu0 %v1374
    %v2345 = vpop.f32.mrb[0].mxu0
    %v2346 = vadd.f32 %v2249, %v2345
    %v2347 = vpop.f32.mrb[0].mxu0
    %v2348 = vpop.f32.mrb[0].mxu0
    %v2349 = vadd.f32 %v2252, %v2348
    %v2350 = vpop.f32.mrb[0].mxu0
    %2351 = vmatprep.mubr.bf16.mxu0 %v1384
    %2352 = vmatmul.mubr.bf16.gmra.mrb[0].mxu0 %v1383
    %v2353 = vpop.f32.mrb[0].mxu0
    %v2354 = vadd.f32 %v2257, %v2353
    %v2355 = vpop.f32.mrb[0].mxu0
    %v2356 = vpop.f32.mrb[0].mxu0
    %v2357 = vadd.f32 %v2260, %v2356
    %v2358 = vpop.f32.mrb[0].mxu0
    %2359 = vmatprep.mubr.bf16.mxu0 %v1393
    %2360 = vmatmul.mubr.bf16.gmra.mrb[0].mxu0 %v1392
    %v2361 = vpop.f32.mrb[0].mxu0
    %v2362 = vadd.f32 %v2265, %v2361
    %v2363 = vpop.f32.mrb[0].mxu0
    %v2364 = vpop.f32.mrb[0].mxu0
    %v2365 = vadd.f32 %v2268, %v2364
    %v2366 = vpop.f32.mrb[0].mxu0
    %2367 = vmatprep.mubr.bf16.mxu0 %v1402
    %2368 = vmatmul.mubr.bf16.gmra.mrb[0].mxu0 %v1401
    %v2369 = vpop.f32.mrb[0].mxu0
    %v2370 = vadd.f32 %v2273, %v2369
    %v2371 = vpop.f32.mrb[0].mxu0
    %v2372 = vpop.f32.mrb[0].mxu0
    %v2373 = vadd.f32 %v2276, %v2372
    %v2374 = vpop.f32.mrb[0].mxu0
    %2375 = vmatprep.mubr.bf16.mxu0 %v1411
    %2376 = vmatmul.mubr.bf16.gmra.mrb[0].mxu0 %v1410
    %v2377 = vpop.f32.mrb[0].mxu0
    %v2378 = vadd.f32 %v2281, %v2377
    %v2379 = vpop.f32.mrb[0].mxu0
    %v2380 = vpop.f32.mrb[0].mxu0
    %v2381 = vadd.f32 %v2284, %v2380
    %v2382 = vpop.f32.mrb[0].mxu0
    %2383 = vdwg.mxu0
    %2384 = vmatprep.subr.bf16.mxu0 0
    %2385 = vmatpush1.bf16.msra.mxu0 %v1916
    %2386 = vmatprep.subr.bf16.mxu0 0
    %2387 = vmatpush1.bf16.msra.mxu0 %v1917
    %2388 = vmatprep.subr.bf16.mxu0 0
    %2389 = vmatpush1.bf16.msra.mxu0 %v1918
    %2390 = vmatprep.subr.bf16.mxu0 0
    %2391 = vmatpush1.bf16.msra.mxu0 %v1919
    %2392 = vmatprep.subr.bf16.mxu0 0
    %2393 = vmatpush1.bf16.msra.mxu0 %v1920
    %2394 = vmatprep.subr.bf16.mxu0 0
    %2395 = vmatpush1.bf16.msra.mxu0 %v1921
    %2396 = vmatprep.subr.bf16.mxu0 0
    %2397 = vmatpush1.bf16.msra.mxu0 %v1922
    %2398 = vmatprep.subr.bf16.mxu0 0
    %2399 = vmatpush1.bf16.msra.mxu0 %v1923
    %2400 = vmatprep.subr.bf16.mxu0 0
    %2401 = vmatpush1.bf16.msra.mxu0 0
    %2402 = vmatprep.subr.bf16.mxu0 0
    %2403 = vmatpush1.bf16.msra.mxu0 0
    %2404 = vmatprep.subr.bf16.mxu0 0
    %2405 = vmatpush1.bf16.msra.mxu0 0
    %2406 = vmatprep.subr.bf16.mxu0 0
    %2407 = vmatpush1.bf16.msra.mxu0 0
    %2408 = vmatprep.subr.bf16.mxu0 0
    %2409 = vmatpush1.bf16.msra.mxu0 0
    %2410 = vmatprep.subr.bf16.mxu0 0
    %2411 = vmatpush1.bf16.msra.mxu0 0
    %2412 = vmatprep.subr.bf16.mxu0 0
    %2413 = vmatpush1.bf16.msra.mxu0 0
    %2414 = vmatprep.subr.bf16.mxu0 0
    %2415 = vmatpush1.bf16.msra.mxu0 0
    %2416 = vmatprep.mubr.bf16.mxu0 0
    %2417 = vmatmul.mubr.bf16.gmra.mrb[0].mxu0 %v1349
    %v2418 = vpop.f32.mrb[0].mxu0
    %v2419 = vadd.f32 %v2322, %v2418
    %v2420 = vpop.f32.mrb[0].mxu0
    %v2421 = vpop.f32.mrb[0].mxu0
    %v2422 = vadd.f32 %v2325, %v2421
    %v2423 = vpop.f32.mrb[0].mxu0
    %2424 = vmatprep.mubr.bf16.mxu0 0
    %2425 = vmatmul.mubr.bf16.gmra.mrb[0].mxu0 %v1358
    %v2426 = vpop.f32.mrb[0].mxu0
    %v2427 = vadd.f32 %v2330, %v2426
    %v2428 = vpop.f32.mrb[0].mxu0
    %v2429 = vpop.f32.mrb[0].mxu0
    %v2430 = vadd.f32 %v2333, %v2429
    %v2431 = vpop.f32.mrb[0].mxu0
    %2432 = vmatprep.mubr.bf16.mxu0 0
    %2433 = vmatmul.mubr.bf16.gmra.mrb[0].mxu0 %v1367
    %v2434 = vpop.f32.mrb[0].mxu0
    %v2435 = vadd.f32 %v2338, %v2434
    %v2436 = vpop.f32.mrb[0].mxu0
    %v2437 = vpop.f32.mrb[0].mxu0
    %v2438 = vadd.f32 %v2341, %v2437
    %v2439 = vpop.f32.mrb[0].mxu0
    %2440 = vmatprep.mubr.bf16.mxu0 0
    %2441 = vmatmul.mubr.bf16.gmra.mrb[0].mxu0 %v1376
    %v2442 = vpop.f32.mrb[0].mxu0
    %v2443 = vadd.f32 %v2346, %v2442
    %v2444 = vpop.f32.mrb[0].mxu0
    %v2445 = vpop.f32.mrb[0].mxu0
    %v2446 = vadd.f32 %v2349, %v2445
    %v2447 = vpop.f32.mrb[0].mxu0
    %2448 = vmatprep.mubr.bf16.mxu0 0
    %2449 = vmatmul.mubr.bf16.gmra.mrb[0].mxu0 %v1385
    %v2450 = vpop.f32.mrb[0].mxu0
    %v2451 = vadd.f32 %v2354, %v2450
    %v2452 = vpop.f32.mrb[0].mxu0
    %v2453 = vpop.f32.mrb[0].mxu0
    %v2454 = vadd.f32 %v2357, %v2453
    %v2455 = vpop.f32.mrb[0].mxu0
    %2456 = vmatprep.mubr.bf16.mxu0 0
    %2457 = vmatmul.mubr.bf16.gmra.mrb[0].mxu0 %v1394
    %v2458 = vpop.f32.mrb[0].mxu0
    %v2459 = vadd.f32 %v2362, %v2458
    %v2460 = vpop.f32.mrb[0].mxu0
    %v2461 = vpop.f32.mrb[0].mxu0
    %v2462 = vadd.f32 %v2365, %v2461
    %v2463 = vpop.f32.mrb[0].mxu0
    %2464 = vmatprep.mubr.bf16.mxu0 0
    %2465 = vmatmul.mubr.bf16.gmra.mrb[0].mxu0 %v1403
    %v2466 = vpop.f32.mrb[0].mxu0
    %v2467 = vadd.f32 %v2370, %v2466
    %v2468 = vpop.f32.mrb[0].mxu0
    %v2469 = vpop.f32.mrb[0].mxu0
    %v2470 = vadd.f32 %v2373, %v2469
    %v2471 = vpop.f32.mrb[0].mxu0
    %2472 = vmatprep.mubr.bf16.mxu0 0
    %2473 = vmatmul.mubr.bf16.gmra.mrb[0].mxu0 %v1412
    %v2474 = vpop.f32.mrb[0].mxu0
    %v2475 = vadd.f32 %v2378, %v2474
    %v2476 = vpop.f32.mrb[0].mxu0
    %v2477 = vpop.f32.mrb[0].mxu0
    %v2478 = vadd.f32 %v2381, %v2477
    %v2479 = vpop.f32.mrb[0].mxu0
    %2480 = vdwg.mxu0
    %2481 = vst [vmem:[#allocation3] sm:$0xff] %v2419
    %2482 = vst [vmem:[#allocation3 + $0x8] sm:$0xff] %v2422
    %2483 = vst [vmem:[#allocation3 + $0x10] sm:$0xff] %v2427
    %2484 = vst [vmem:[#allocation3 + $0x18] sm:$0xff] %v2430
    %2485 = vst [vmem:[#allocation3 + $0x20] sm:$0xff] %v2435
    %2486 = vst [vmem:[#allocation3 + $0x28] sm:$0xff] %v2438
    %2487 = vst [vmem:[#allocation3 + $0x30] sm:$0xff] %v2443
    %2488 = vst [vmem:[#allocation3 + $0x38] sm:$0xff] %v2446
    %2489 = vst [vmem:[#allocation3 + $0x40] sm:$0xff] %v2451
    %2490 = vst [vmem:[#allocation3 + $0x48] sm:$0xff] %v2454
    %2491 = vst [vmem:[#allocation3 + $0x50] sm:$0xff] %v2459
    %2492 = vst [vmem:[#allocation3 + $0x58] sm:$0xff] %v2462
    %2493 = vst [vmem:[#allocation3 + $0x60] sm:$0xff] %v2467
    %2494 = vst [vmem:[#allocation3 + $0x68] sm:$0xff] %v2470
    %2495 = vst [vmem:[#allocation3 + $0x70] sm:$0xff] %v2475
    %2496 = vst [vmem:[#allocation3 + $0x78] sm:$0xff] %v2478
    // Predicated region
    $region14: #{downsample2d.1} parent=1 // pred_check
      _
    $region15: #{downsample2d.1} parent=1 // pred_check_branch
      %2498 = sbr.rel (0) target = $region17
    $region16: #{downsample2d.1} parent=1 // pred_region
      %s2500 = ssub.s32 2048, 2048
      %2501 = vsyncadd [#allocation4], %s2500
      %s2502 = sshll.u32 [#allocation3], 4
      %s2503 = int_to_ptr.vmem [resolvable:$true] %s2502
      %2508 = dma.vmem_to_hbm [thread:$0]  %s2503, 2048, %s3, [#allocation4], 128, 128, 8
    $region17: #{downsample2d.1} parent=1 // pred_fallthru
      _
    // Predicated region
    $region18: #{downsample2d.1} parent=1 // pred_check
      _
    $region19: #{downsample2d.1} parent=1 // pred_check_branch
      %2510 = sbr.rel (0) target = $region21
    $region20: #{downsample2d.1} parent=1 // pred_region
      %2511 = dma.done [#allocation4], 2048
    $region21: #{downsample2d.1} parent=1 // pred_fallthru
      _
    %2512 = vsyncpa [#allocation4], 1

</llo_original>
